<compile_context>
chip_gen: v7x
topology: tpu7x:2x2x1
jax: 0.10.0
libtpu: 0.0.40
codegen_flags: <defaults>
</compile_context>

<pallas_src>
import functools

import jax
import jax.numpy as jnp
from jax import lax
from jax.experimental import pallas as pl
from jax.experimental.pallas import tpu as pltpu


def _bilstm_kernel(x_ref,                   # (T*B, nIn)    matmul dtype
                   wih_ref,                 # (nIn, 8H)     matmul dtype  [fwd | bwd]
                   b_ih_ref,                # (1, 8H)       f32           [fwd | bwd]
                   whh_f_ref, whh_b_ref,    # (H, 4H)       f32
                   w_emb_ref,               # (2H, nOutP)   matmul dtype
                   b_emb_ref,               # (1, nOutP)    f32
                   out_ref,                 # (T*B, nOutP)  f32
                   gates_ref,               # (T*B, 8H)     f32 scratch (input proj)
                   rec_ref,                 # (T*B, 2H)     f32 scratch (hidden states)
                   *, T, B, H):
    # ---- Phase 1: fused input projection for both directions (one MXU GEMM) ----
    gates_ref[...] = (jnp.dot(x_ref[...], wih_ref[...],
                              preferred_element_type=jnp.float32)
                      + b_ih_ref[...])

    # Gate order was permuted to [i, f, o, g] in the wrapper:
    #   one sigmoid over the leading 3H lanes, one tanh over the trailing H.
    def gate_math(gates, c):
        ifo = jax.nn.sigmoid(gates[:, 0:3 * H])
        g = jnp.tanh(gates[:, 3 * H:4 * H])
        c_new = ifo[:, H:2 * H] * c + ifo[:, 0:H] * g
        h_new = ifo[:, 2 * H:3 * H] * jnp.tanh(c_new)
        return h_new, c_new

    zeros = jnp.zeros((B, H), jnp.float32)

    # ---- Phase 2: fused fwd/bwd recurrence (two independent chains / iter) ----
    def body(t, carry):
        h_f, c_f, h_b, c_b = carry
        rf = pl.multiple_of(t * B, B)
        rb = pl.multiple_of((T - 1 - t) * B, B)

        gates_f = gates_ref[pl.ds(rf, B), 0:4 * H] + jnp.dot(
            h_f, whh_f_ref[...], preferred_element_type=jnp.float32)
        h_f, c_f = gate_math(gates_f, c_f)
        rec_ref[pl.ds(rf, B), 0:H] = h_f

        gates_b = gates_ref[pl.ds(rb, B), 4 * H:8 * H] + jnp.dot(
            h_b, whh_b_ref[...], preferred_element_type=jnp.float32)
        h_b, c_b = gate_math(gates_b, c_b)
        rec_ref[pl.ds(rb, B), H:2 * H] = h_b

        return (h_f, c_f, h_b, c_b)

    unroll = True if T <= 16 else 4
    lax.fori_loop(0, T, body, (zeros, zeros, zeros, zeros), unroll=unroll)

    # ---- Phase 3: embedding — single K=2H matmul, lane-dense output store ----
    rec = rec_ref[...].astype(w_emb_ref.dtype)
    out_ref[...] = (jnp.dot(rec, w_emb_ref[...],
                            preferred_element_type=jnp.float32)
                    + b_emb_ref[...]).astype(out_ref.dtype)


def _round_up(v, m):
    return -(-v // m) * m


def _reorder_ifog(w, H):
    """PyTorch LSTM gate block order is [i, f, g, o]; permute to [i, f, o, g]."""
    return jnp.concatenate([w[:2 * H], w[3 * H:4 * H], w[2 * H:3 * H]], axis=0)


def bidirectional_lstm(x, params, matmul_dtype=jnp.bfloat16):
    """x: (T, B, nIn) float32 -> (T, B, nOut) float32.

    matmul_dtype controls only the MXU operands of the two big GEMM phases
    (x, W_ih, W_emb); all gate/elementwise math and the recurrent matmuls
    stay float32.
    """
    T, B, nIn = x.shape
    H = params["w_hh_f"].shape[1]
    nOut = params["w_emb"].shape[0]

    B_pad = _round_up(B, 8)          # sublane tile
    nOut_pad = _round_up(nOut, 128)  # lane-dense output store

    # Pad batch, flatten (T, B_pad) -> rows so the big matmuls have a real M.
    x_p = jnp.pad(x.astype(jnp.float32), ((0, 0), (0, B_pad - B), (0, 0)))
    x2 = x_p.reshape(T * B_pad, nIn).astype(matmul_dtype)

    # --- plain-JAX weight prep: gate reorder, transpose, fuse, fold, pad ---
    wih_f_t = _reorder_ifog(params["w_ih_f"], H).T           # (nIn, 4H)
    wih_b_t = _reorder_ifog(params["w_ih_b"], H).T           # (nIn, 4H)
    wih_cat = jnp.concatenate([wih_f_t, wih_b_t], axis=1).astype(matmul_dtype)  # (nIn, 8H)

    b_f = _reorder_ifog(params["b_ih_f"] + params["b_hh_f"], H)
    b_b = _reorder_ifog(params["b_ih_b"] + params["b_hh_b"], H)
    b_ih_cat = jnp.concatenate([b_f, b_b]).reshape(1, 8 * H).astype(jnp.float32)

    whh_f_t = _reorder_ifog(params["w_hh_f"], H).T.astype(jnp.float32)  # (H, 4H)
    whh_b_t = _reorder_ifog(params["w_hh_b"], H).T.astype(jnp.float32)  # (H, 4H)

    # nn.Linear(2H, nOut): rows 0:H of w_emb.T act on fwd h, H:2H on bwd h —
    # matches the [fwd | bwd] column layout of the rec scratch.
    w_emb_t = jnp.pad(params["w_emb"].T,
                      ((0, 0), (0, nOut_pad - nOut))).astype(matmul_dtype)  # (2H, nOut_pad)
    b_emb = jnp.pad(params["b_emb"],
                    (0, nOut_pad - nOut)).reshape(1, nOut_pad).astype(jnp.float32)

    operands = (x2, wih_cat, b_ih_cat, whh_f_t, whh_b_t, w_emb_t, b_emb)

    # --- VMEM budget (no grid => nothing double-buffered; cap to real HW) ---
    f32b = 4
    scratch_bytes = (T * B_pad * 8 * H + T * B_pad * 2 * H) * f32b
    io_bytes = (sum(int(a.size) * a.dtype.itemsize for a in operands)
                + T * B_pad * nOut_pad * f32b)                 # HBM in + out
    try:
        vmem_cap = int(pltpu.get_tpu_info().vmem_capacity_bytes)
    except Exception:
        vmem_cap = 64 << 20                                    # v7x-safe fallback
    vmem_limit = int(min(vmem_cap - (4 << 20),
                         max(io_bytes + scratch_bytes + (2 << 20), 8 << 20)))

    flops = int(2 * T * B_pad * (nIn * 8 * H          # fused input projection
                                 + 2 * H * 4 * H      # two recurrent matmuls
                                 + 2 * H * nOut_pad)) # embedding
    cost = pl.CostEstimate(flops=flops,
                           transcendentals=int(2 * T * B_pad * 5 * H),
                           bytes_accessed=int(io_bytes))       # HBM I/O only

    vmem_spec = pl.BlockSpec(memory_space=pltpu.MemorySpace.VMEM)

    out2d = pl.pallas_call(
        functools.partial(_bilstm_kernel, T=T, B=B_pad, H=H),
        out_shape=jax.ShapeDtypeStruct((T * B_pad, nOut_pad), jnp.float32),
        in_specs=[vmem_spec] * len(operands),
        out_specs=vmem_spec,
        scratch_shapes=[
            pltpu.VMEM((T * B_pad, 8 * H), jnp.float32),   # fused input-proj gates
            pltpu.VMEM((T * B_pad, 2 * H), jnp.float32),   # [fwd | bwd] hidden states
        ],
        compiler_params=pltpu.CompilerParams(vmem_limit_bytes=vmem_limit),
        cost_estimate=cost,
    )(*operands)

    # Slice the padding back off outside the kernel (lane/sublane-dense inside).
    return out2d.reshape(T, B_pad, nOut_pad)[:, :B, :nOut]


# ------------------------- pure-JAX reference -------------------------------
def _lstm_dir_ref(x, w_ih, w_hh, b_ih, b_hh, reverse):
    T, B, _ = x.shape
    H = w_hh.shape[1]

    def step(carry, x_t):
        h, c = carry
        gates = x_t @ w_ih.T + h @ w_hh.T + b_ih + b_hh
        i = jax.nn.sigmoid(gates[:, 0:H])
        f = jax.nn.sigmoid(gates[:, H:2 * H])
        g = jnp.tanh(gates[:, 2 * H:3 * H])
        o = jax.nn.sigmoid(gates[:, 3 * H:4 * H])
        c = f * c + i * g
        h = o * jnp.tanh(c)
        return (h, c), h

    h0 = jnp.zeros((B, H), jnp.float32)
    c0 = jnp.zeros((B, H), jnp.float32)
    xs = x[::-1] if reverse else x
    _, hs = lax.scan(step, (h0, c0), xs)
    return hs[::-1] if reverse else hs


def bidirectional_lstm_ref(x, params):
    T, B, _ = x.shape
    fwd = _lstm_dir_ref(x, params["w_ih_f"], params["w_hh_f"],
                        params["b_ih_f"], params["b_hh_f"], reverse=False)
    bwd = _lstm_dir_ref(x, params["w_ih_b"], params["w_hh_b"],
                        params["b_ih_b"], params["b_hh_b"], reverse=True)
    rec = jnp.concatenate([fwd, bwd], axis=-1)                 # (T, B, 2H)
    t_rec = rec.reshape(T * B, -1)
    out = t_rec @ params["w_emb"].T + params["b_emb"]
    return out.reshape(T, B, -1)


# ------------------------------ params --------------------------------------
def init_params(key, nIn, nHidden, nOut):
    H = nHidden
    kH = 1.0 / jnp.sqrt(jnp.float32(H))
    k2 = 1.0 / jnp.sqrt(jnp.float32(2 * H))
    ks = jax.random.split(key, 10)

    def u(k_, shape, bound):
        return jax.random.uniform(k_, shape, jnp.float32, -bound, bound)

    return dict(
        w_ih_f=u(ks[0], (4 * H, nIn), kH), w_hh_f=u(ks[1], (4 * H, H), kH),
        b_ih_f=u(ks[2], (4 * H,), kH),     b_hh_f=u(ks[3], (4 * H,), kH),
        w_ih_b=u(ks[4], (4 * H, nIn), kH), w_hh_b=u(ks[5], (4 * H, H), kH),
        b_ih_b=u(ks[6], (4 * H,), kH),     b_hh_b=u(ks[7], (4 * H,), kH),
        w_emb=u(ks[8], (nOut, 2 * H), k2), b_emb=u(ks[9], (nOut,), k2),
    )


if __name__ == "__main__":
    T, B, nIn, nHidden, nOut = 8, 2, 32, 32, 16

    key = jax.random.PRNGKey(0)
    kx, kp = jax.random.split(key)
    x = jax.random.normal(kx, (T, B, nIn), jnp.float32)
    params = init_params(kp, nIn, nHidden, nOut)

    ref = bidirectional_lstm_ref(x, params)

    # Full-f32 MXU path: bitwise-close to the reference.
    out_f32 = jax.block_until_ready(
        bidirectional_lstm(x, params, matmul_dtype=jnp.float32))
    assert out_f32.shape == (T, B, nOut)
    assert jnp.allclose(out_f32, ref, rtol=1e-3, atol=2e-3), (
        float(jnp.max(jnp.abs(out_f32 - ref))))

    # bf16 MXU operands (bf16-native MXUs on v5e/v6e/v7x); gate math stays f32,
    # so only matmul-input rounding differs -> loose tolerance.
    out_bf16 = jax.block_until_ready(
        bidirectional_lstm(x, params, matmul_dtype=jnp.bfloat16))
    assert out_bf16.shape == (T, B, nOut)
    assert jnp.allclose(out_bf16, ref, rtol=5e-2, atol=1e-1), (
        float(jnp.max(jnp.abs(out_bf16 - ref))))

    print("KERNEL_OK")
</pallas_src>

<mosaic_0001>
module attributes {stable_mosaic.version = 11 : i64} {
  func.func @_bilstm_kernel(%arg0: memref<64x32xf32, #tpu.memory_space<vmem>>, %arg1: memref<32x256xf32, #tpu.memory_space<vmem>>, %arg2: memref<1x256xf32, #tpu.memory_space<vmem>>, %arg3: memref<32x128xf32, #tpu.memory_space<vmem>>, %arg4: memref<32x128xf32, #tpu.memory_space<vmem>>, %arg5: memref<64x128xf32, #tpu.memory_space<vmem>>, %arg6: memref<1x128xf32, #tpu.memory_space<vmem>>, %arg7: memref<64x128xf32, #tpu.memory_space<vmem>>, %arg8: memref<64x256xf32, #tpu.memory_space<vmem>>, %arg9: memref<64x64xf32, #tpu.memory_space<vmem>>) attributes {dimension_semantics = [], scalar_prefetch = 0 : i64, scratch_operands = 2 : i64, tpu.core_type = #tpu.core_type<tc>} {
    %c0 = arith.constant 0 : index
    %c0_0 = arith.constant 0 : index
    %0 = vector.load %arg0[%c0, %c0_0] : memref<64x32xf32, #tpu.memory_space<vmem>>, vector<64x32xf32>
    %c0_1 = arith.constant 0 : index
    %c0_2 = arith.constant 0 : index
    %1 = vector.load %arg1[%c0_1, %c0_2] : memref<32x256xf32, #tpu.memory_space<vmem>>, vector<32x256xf32>
    %cst = arith.constant dense<0.000000e+00> : vector<64x256xf32>
    %2 = tpu.matmul %0, %1, %cst {dimension_numbers = #tpu.dot_dimension_numbers<[1], [0], [0], [1], [0, 0, 1, 1], [], []>} : vector<64x32xf32>, vector<32x256xf32>, vector<64x256xf32> -> vector<64x256xf32>
    %c0_3 = arith.constant 0 : index
    %c0_4 = arith.constant 0 : index
    %3 = vector.load %arg2[%c0_3, %c0_4] : memref<1x256xf32, #tpu.memory_space<vmem>>, vector<1x256xf32>
    %4 = vector.broadcast %3 : vector<1x256xf32> to vector<64x256xf32>
    %5 = arith.addf %2, %4 : vector<64x256xf32>
    %c0_5 = arith.constant 0 : index
    %c0_6 = arith.constant 0 : index
    %6 = vector.load %arg8[%c0_5, %c0_6] : memref<64x256xf32, #tpu.memory_space<vmem>>, vector<64x256xf32>
    tpu.vector_store %arg8[%c0_5, %c0_6], %5 {strides = array<i32>} : memref<64x256xf32, #tpu.memory_space<vmem>>, vector<64x256xf32>,
    %cst_7 = arith.constant 0.000000e+00 : f32
    %7 = vector.broadcast %cst_7 : f32 to vector<8x32xf32>
    %c0_i32 = arith.constant 0 : i32
    %c8_i32 = arith.constant 8 : i32
    %8 = arith.muli %c0_i32, %c8_i32 : i32
    %9 = tpu.assume_multiple %8, 8 : i32
    %c7_i32 = arith.constant 7 : i32
    %10 = arith.subi %c7_i32, %c0_i32 : i32
    %c8_i32_8 = arith.constant 8 : i32
    %11 = arith.muli %10, %c8_i32_8 : i32
    %12 = tpu.assume_multiple %11, 8 : i32
    %13 = arith.index_cast %9 : i32 to index
    %c0_9 = arith.constant 0 : index
    %14 = vector.load %arg8[%13, %c0_9] : memref<64x256xf32, #tpu.memory_space<vmem>>, vector<8x128xf32>
    %c0_10 = arith.constant 0 : index
    %c0_11 = arith.constant 0 : index
    %15 = vector.load %arg3[%c0_10, %c0_11] : memref<32x128xf32, #tpu.memory_space<vmem>>, vector<32x128xf32>
    %cst_12 = arith.constant dense<0.000000e+00> : vector<8x128xf32>
    %16 = tpu.matmul %7, %15, %cst_12 {dimension_numbers = #tpu.dot_dimension_numbers<[1], [0], [0], [1], [0, 0, 1, 1], [], []>} : vector<8x32xf32>, vector<32x128xf32>, vector<8x128xf32> -> vector<8x128xf32>
    %17 = arith.addf %14, %16 : vector<8x128xf32>
    %18 = vector.extract_strided_slice %17 {offsets = [0, 0], sizes = [8, 96], strides = [1, 1]} : vector<8x128xf32> to vector<8x96xf32>
    %19 = arith.negf %18 : vector<8x96xf32>
    %20 = math.exp %19 : vector<8x96xf32>
    %cst_13 = arith.constant 1.000000e+00 : f32
    %21 = vector.broadcast %cst_13 : f32 to vector<8x96xf32>
    %22 = arith.addf %21, %20 : vector<8x96xf32>
    %23 = arith.divf %21, %22 : vector<8x96xf32>
    %24 = vector.extract_strided_slice %17 {offsets = [0, 96], sizes = [8, 32], strides = [1, 1]} : vector<8x128xf32> to vector<8x32xf32>
    %25 = math.tanh %24 : vector<8x32xf32>
    %26 = vector.extract_strided_slice %23 {offsets = [0, 32], sizes = [8, 32], strides = [1, 1]} : vector<8x96xf32> to vector<8x32xf32>
    %27 = arith.mulf %26, %7 : vector<8x32xf32>
    %28 = vector.extract_strided_slice %23 {offsets = [0, 0], sizes = [8, 32], strides = [1, 1]} : vector<8x96xf32> to vector<8x32xf32>
    %29 = arith.mulf %28, %25 : vector<8x32xf32>
    %30 = arith.addf %27, %29 : vector<8x32xf32>
    %31 = vector.extract_strided_slice %23 {offsets = [0, 64], sizes = [8, 32], strides = [1, 1]} : vector<8x96xf32> to vector<8x32xf32>
    %32 = math.tanh %30 : vector<8x32xf32>
    %33 = arith.mulf %31, %32 : vector<8x32xf32>
    %34 = arith.index_cast %9 : i32 to index
    %c0_14 = arith.constant 0 : index
    %35 = vector.load %arg9[%34, %c0_14] : memref<64x64xf32, #tpu.memory_space<vmem>>, vector<8x32xf32>
    tpu.vector_store %arg9[%34, %c0_14], %33 {strides = array<i32>} : memref<64x64xf32, #tpu.memory_space<vmem>>, vector<8x32xf32>,
    %36 = arith.index_cast %12 : i32 to index
    %c128 = arith.constant 128 : index
    %37 = vector.load %arg8[%36, %c128] : memref<64x256xf32, #tpu.memory_space<vmem>>, vector<8x128xf32>
    %c0_15 = arith.constant 0 : index
    %c0_16 = arith.constant 0 : index
    %38 = vector.load %arg4[%c0_15, %c0_16] : memref<32x128xf32, #tpu.memory_space<vmem>>, vector<32x128xf32>
    %cst_17 = arith.constant dense<0.000000e+00> : vector<8x128xf32>
    %39 = tpu.matmul %7, %38, %cst_17 {dimension_numbers = #tpu.dot_dimension_numbers<[1], [0], [0], [1], [0, 0, 1, 1], [], []>} : vector<8x32xf32>, vector<32x128xf32>, vector<8x128xf32> -> vector<8x128xf32>
    %40 = arith.addf %37, %39 : vector<8x128xf32>
    %41 = vector.extract_strided_slice %40 {offsets = [0, 0], sizes = [8, 96], strides = [1, 1]} : vector<8x128xf32> to vector<8x96xf32>
    %42 = arith.negf %41 : vector<8x96xf32>
    %43 = math.exp %42 : vector<8x96xf32>
    %cst_18 = arith.constant 1.000000e+00 : f32
    %44 = vector.broadcast %cst_18 : f32 to vector<8x96xf32>
    %45 = arith.addf %44, %43 : vector<8x96xf32>
    %46 = arith.divf %44, %45 : vector<8x96xf32>
    %47 = vector.extract_strided_slice %40 {offsets = [0, 96], sizes = [8, 32], strides = [1, 1]} : vector<8x128xf32> to vector<8x32xf32>
    %48 = math.tanh %47 : vector<8x32xf32>
    %49 = vector.extract_strided_slice %46 {offsets = [0, 32], sizes = [8, 32], strides = [1, 1]} : vector<8x96xf32> to vector<8x32xf32>
    %50 = arith.mulf %49, %7 : vector<8x32xf32>
    %51 = vector.extract_strided_slice %46 {offsets = [0, 0], sizes = [8, 32], strides = [1, 1]} : vector<8x96xf32> to vector<8x32xf32>
    %52 = arith.mulf %51, %48 : vector<8x32xf32>
    %53 = arith.addf %50, %52 : vector<8x32xf32>
    %54 = vector.extract_strided_slice %46 {offsets = [0, 64], sizes = [8, 32], strides = [1, 1]} : vector<8x96xf32> to vector<8x32xf32>
    %55 = math.tanh %53 : vector<8x32xf32>
    %56 = arith.mulf %54, %55 : vector<8x32xf32>
    %57 = arith.index_cast %12 : i32 to index
    %c32 = arith.constant 32 : index
    %58 = vector.load %arg9[%57, %c32] : memref<64x64xf32, #tpu.memory_space<vmem>>, vector<8x32xf32>
    tpu.vector_store %arg9[%57, %c32], %56 {strides = array<i32>} : memref<64x64xf32, #tpu.memory_space<vmem>>, vector<8x32xf32>,
    %c1_i32 = arith.constant 1 : i32
    %c8_i32_19 = arith.constant 8 : i32
    %59 = arith.muli %c1_i32, %c8_i32_19 : i32
    %60 = tpu.assume_multiple %59, 8 : i32
    %c7_i32_20 = arith.constant 7 : i32
    %61 = arith.subi %c7_i32_20, %c1_i32 : i32
    %c8_i32_21 = arith.constant 8 : i32
    %62 = arith.muli %61, %c8_i32_21 : i32
    %63 = tpu.assume_multiple %62, 8 : i32
    %64 = arith.index_cast %60 : i32 to index
    %c0_22 = arith.constant 0 : index
    %65 = vector.load %arg8[%64, %c0_22] : memref<64x256xf32, #tpu.memory_space<vmem>>, vector<8x128xf32>
    %c0_23 = arith.constant 0 : index
    %c0_24 = arith.constant 0 : index
    %66 = vector.load %arg3[%c0_23, %c0_24] : memref<32x128xf32, #tpu.memory_space<vmem>>, vector<32x128xf32>
    %cst_25 = arith.constant dense<0.000000e+00> : vector<8x128xf32>
    %67 = tpu.matmul %33, %66, %cst_25 {dimension_numbers = #tpu.dot_dimension_numbers<[1], [0], [0], [1], [0, 0, 1, 1], [], []>} : vector<8x32xf32>, vector<32x128xf32>, vector<8x128xf32> -> vector<8x128xf32>
    %68 = arith.addf %65, %67 : vector<8x128xf32>
    %69 = vector.extract_strided_slice %68 {offsets = [0, 0], sizes = [8, 96], strides = [1, 1]} : vector<8x128xf32> to vector<8x96xf32>
    %70 = arith.negf %69 : vector<8x96xf32>
    %71 = math.exp %70 : vector<8x96xf32>
    %cst_26 = arith.constant 1.000000e+00 : f32
    %72 = vector.broadcast %cst_26 : f32 to vector<8x96xf32>
    %73 = arith.addf %72, %71 : vector<8x96xf32>
    %74 = arith.divf %72, %73 : vector<8x96xf32>
    %75 = vector.extract_strided_slice %68 {offsets = [0, 96], sizes = [8, 32], strides = [1, 1]} : vector<8x128xf32> to vector<8x32xf32>
    %76 = math.tanh %75 : vector<8x32xf32>
    %77 = vector.extract_strided_slice %74 {offsets = [0, 32], sizes = [8, 32], strides = [1, 1]} : vector<8x96xf32> to vector<8x32xf32>
    %78 = arith.mulf %77, %30 : vector<8x32xf32>
    %79 = vector.extract_strided_slice %74 {offsets = [0, 0], sizes = [8, 32], strides = [1, 1]} : vector<8x96xf32> to vector<8x32xf32>
    %80 = arith.mulf %79, %76 : vector<8x32xf32>
    %81 = arith.addf %78, %80 : vector<8x32xf32>
    %82 = vector.extract_strided_slice %74 {offsets = [0, 64], sizes = [8, 32], strides = [1, 1]} : vector<8x96xf32> to vector<8x32xf32>
    %83 = math.tanh %81 : vector<8x32xf32>
    %84 = arith.mulf %82, %83 : vector<8x32xf32>
    %85 = arith.index_cast %60 : i32 to index
    %c0_27 = arith.constant 0 : index
    %86 = vector.load %arg9[%85, %c0_27] : memref<64x64xf32, #tpu.memory_space<vmem>>, vector<8x32xf32>
    tpu.vector_store %arg9[%85, %c0_27], %84 {strides = array<i32>} : memref<64x64xf32, #tpu.memory_space<vmem>>, vector<8x32xf32>,
    %87 = arith.index_cast %63 : i32 to index
    %c128_28 = arith.constant 128 : index
    %88 = vector.load %arg8[%87, %c128_28] : memref<64x256xf32, #tpu.memory_space<vmem>>, vector<8x128xf32>
    %c0_29 = arith.constant 0 : index
    %c0_30 = arith.constant 0 : index
    %89 = vector.load %arg4[%c0_29, %c0_30] : memref<32x128xf32, #tpu.memory_space<vmem>>, vector<32x128xf32>
    %cst_31 = arith.constant dense<0.000000e+00> : vector<8x128xf32>
    %90 = tpu.matmul %56, %89, %cst_31 {dimension_numbers = #tpu.dot_dimension_numbers<[1], [0], [0], [1], [0, 0, 1, 1], [], []>} : vector<8x32xf32>, vector<32x128xf32>, vector<8x128xf32> -> vector<8x128xf32>
    %91 = arith.addf %88, %90 : vector<8x128xf32>
    %92 = vector.extract_strided_slice %91 {offsets = [0, 0], sizes = [8, 96], strides = [1, 1]} : vector<8x128xf32> to vector<8x96xf32>
    %93 = arith.negf %92 : vector<8x96xf32>
    %94 = math.exp %93 : vector<8x96xf32>
    %cst_32 = arith.constant 1.000000e+00 : f32
    %95 = vector.broadcast %cst_32 : f32 to vector<8x96xf32>
    %96 = arith.addf %95, %94 : vector<8x96xf32>
    %97 = arith.divf %95, %96 : vector<8x96xf32>
    %98 = vector.extract_strided_slice %91 {offsets = [0, 96], sizes = [8, 32], strides = [1, 1]} : vector<8x128xf32> to vector<8x32xf32>
    %99 = math.tanh %98 : vector<8x32xf32>
    %100 = vector.extract_strided_slice %97 {offsets = [0, 32], sizes = [8, 32], strides = [1, 1]} : vector<8x96xf32> to vector<8x32xf32>
    %101 = arith.mulf %100, %53 : vector<8x32xf32>
    %102 = vector.extract_strided_slice %97 {offsets = [0, 0], sizes = [8, 32], strides = [1, 1]} : vector<8x96xf32> to vector<8x32xf32>
    %103 = arith.mulf %102, %99 : vector<8x32xf32>
    %104 = arith.addf %101, %103 : vector<8x32xf32>
    %105 = vector.extract_strided_slice %97 {offsets = [0, 64], sizes = [8, 32], strides = [1, 1]} : vector<8x96xf32> to vector<8x32xf32>
    %106 = math.tanh %104 : vector<8x32xf32>
    %107 = arith.mulf %105, %106 : vector<8x32xf32>
    %108 = arith.index_cast %63 : i32 to index
    %c32_33 = arith.constant 32 : index
    %109 = vector.load %arg9[%108, %c32_33] : memref<64x64xf32, #tpu.memory_space<vmem>>, vector<8x32xf32>
    tpu.vector_store %arg9[%108, %c32_33], %107 {strides = array<i32>} : memref<64x64xf32, #tpu.memory_space<vmem>>, vector<8x32xf32>,
    %c2_i32 = arith.constant 2 : i32
    %c8_i32_34 = arith.constant 8 : i32
    %110 = arith.muli %c2_i32, %c8_i32_34 : i32
    %111 = tpu.assume_multiple %110, 8 : i32
    %c7_i32_35 = arith.constant 7 : i32
    %112 = arith.subi %c7_i32_35, %c2_i32 : i32
    %c8_i32_36 = arith.constant 8 : i32
    %113 = arith.muli %112, %c8_i32_36 : i32
    %114 = tpu.assume_multiple %113, 8 : i32
    %115 = arith.index_cast %111 : i32 to index
    %c0_37 = arith.constant 0 : index
    %116 = vector.load %arg8[%115, %c0_37] : memref<64x256xf32, #tpu.memory_space<vmem>>, vector<8x128xf32>
    %c0_38 = arith.constant 0 : index
    %c0_39 = arith.constant 0 : index
    %117 = vector.load %arg3[%c0_38, %c0_39] : memref<32x128xf32, #tpu.memory_space<vmem>>, vector<32x128xf32>
    %cst_40 = arith.constant dense<0.000000e+00> : vector<8x128xf32>
    %118 = tpu.matmul %84, %117, %cst_40 {dimension_numbers = #tpu.dot_dimension_numbers<[1], [0], [0], [1], [0, 0, 1, 1], [], []>} : vector<8x32xf32>, vector<32x128xf32>, vector<8x128xf32> -> vector<8x128xf32>
    %119 = arith.addf %116, %118 : vector<8x128xf32>
    %120 = vector.extract_strided_slice %119 {offsets = [0, 0], sizes = [8, 96], strides = [1, 1]} : vector<8x128xf32> to vector<8x96xf32>
    %121 = arith.negf %120 : vector<8x96xf32>
    %122 = math.exp %121 : vector<8x96xf32>
    %cst_41 = arith.constant 1.000000e+00 : f32
    %123 = vector.broadcast %cst_41 : f32 to vector<8x96xf32>
    %124 = arith.addf %123, %122 : vector<8x96xf32>
    %125 = arith.divf %123, %124 : vector<8x96xf32>
    %126 = vector.extract_strided_slice %119 {offsets = [0, 96], sizes = [8, 32], strides = [1, 1]} : vector<8x128xf32> to vector<8x32xf32>
    %127 = math.tanh %126 : vector<8x32xf32>
    %128 = vector.extract_strided_slice %125 {offsets = [0, 32], sizes = [8, 32], strides = [1, 1]} : vector<8x96xf32> to vector<8x32xf32>
    %129 = arith.mulf %128, %81 : vector<8x32xf32>
    %130 = vector.extract_strided_slice %125 {offsets = [0, 0], sizes = [8, 32], strides = [1, 1]} : vector<8x96xf32> to vector<8x32xf32>
    %131 = arith.mulf %130, %127 : vector<8x32xf32>
    %132 = arith.addf %129, %131 : vector<8x32xf32>
    %133 = vector.extract_strided_slice %125 {offsets = [0, 64], sizes = [8, 32], strides = [1, 1]} : vector<8x96xf32> to vector<8x32xf32>
    %134 = math.tanh %132 : vector<8x32xf32>
    %135 = arith.mulf %133, %134 : vector<8x32xf32>
    %136 = arith.index_cast %111 : i32 to index
    %c0_42 = arith.constant 0 : index
    %137 = vector.load %arg9[%136, %c0_42] : memref<64x64xf32, #tpu.memory_space<vmem>>, vector<8x32xf32>
    tpu.vector_store %arg9[%136, %c0_42], %135 {strides = array<i32>} : memref<64x64xf32, #tpu.memory_space<vmem>>, vector<8x32xf32>,
    %138 = arith.index_cast %114 : i32 to index
    %c128_43 = arith.constant 128 : index
    %139 = vector.load %arg8[%138, %c128_43] : memref<64x256xf32, #tpu.memory_space<vmem>>, vector<8x128xf32>
    %c0_44 = arith.constant 0 : index
    %c0_45 = arith.constant 0 : index
    %140 = vector.load %arg4[%c0_44, %c0_45] : memref<32x128xf32, #tpu.memory_space<vmem>>, vector<32x128xf32>
    %cst_46 = arith.constant dense<0.000000e+00> : vector<8x128xf32>
    %141 = tpu.matmul %107, %140, %cst_46 {dimension_numbers = #tpu.dot_dimension_numbers<[1], [0], [0], [1], [0, 0, 1, 1], [], []>} : vector<8x32xf32>, vector<32x128xf32>, vector<8x128xf32> -> vector<8x128xf32>
    %142 = arith.addf %139, %141 : vector<8x128xf32>
    %143 = vector.extract_strided_slice %142 {offsets = [0, 0], sizes = [8, 96], strides = [1, 1]} : vector<8x128xf32> to vector<8x96xf32>
    %144 = arith.negf %143 : vector<8x96xf32>
    %145 = math.exp %144 : vector<8x96xf32>
    %cst_47 = arith.constant 1.000000e+00 : f32
    %146 = vector.broadcast %cst_47 : f32 to vector<8x96xf32>
    %147 = arith.addf %146, %145 : vector<8x96xf32>
    %148 = arith.divf %146, %147 : vector<8x96xf32>
    %149 = vector.extract_strided_slice %142 {offsets = [0, 96], sizes = [8, 32], strides = [1, 1]} : vector<8x128xf32> to vector<8x32xf32>
    %150 = math.tanh %149 : vector<8x32xf32>
    %151 = vector.extract_strided_slice %148 {offsets = [0, 32], sizes = [8, 32], strides = [1, 1]} : vector<8x96xf32> to vector<8x32xf32>
    %152 = arith.mulf %151, %104 : vector<8x32xf32>
    %153 = vector.extract_strided_slice %148 {offsets = [0, 0], sizes = [8, 32], strides = [1, 1]} : vector<8x96xf32> to vector<8x32xf32>
    %154 = arith.mulf %153, %150 : vector<8x32xf32>
    %155 = arith.addf %152, %154 : vector<8x32xf32>
    %156 = vector.extract_strided_slice %148 {offsets = [0, 64], sizes = [8, 32], strides = [1, 1]} : vector<8x96xf32> to vector<8x32xf32>
    %157 = math.tanh %155 : vector<8x32xf32>
    %158 = arith.mulf %156, %157 : vector<8x32xf32>
    %159 = arith.index_cast %114 : i32 to index
    %c32_48 = arith.constant 32 : index
    %160 = vector.load %arg9[%159, %c32_48] : memref<64x64xf32, #tpu.memory_space<vmem>>, vector<8x32xf32>
    tpu.vector_store %arg9[%159, %c32_48], %158 {strides = array<i32>} : memref<64x64xf32, #tpu.memory_space<vmem>>, vector<8x32xf32>,
    %c3_i32 = arith.constant 3 : i32
    %c8_i32_49 = arith.constant 8 : i32
    %161 = arith.muli %c3_i32, %c8_i32_49 : i32
    %162 = tpu.assume_multiple %161, 8 : i32
    %c7_i32_50 = arith.constant 7 : i32
    %163 = arith.subi %c7_i32_50, %c3_i32 : i32
    %c8_i32_51 = arith.constant 8 : i32
    %164 = arith.muli %163, %c8_i32_51 : i32
    %165 = tpu.assume_multiple %164, 8 : i32
    %166 = arith.index_cast %162 : i32 to index
    %c0_52 = arith.constant 0 : index
    %167 = vector.load %arg8[%166, %c0_52] : memref<64x256xf32, #tpu.memory_space<vmem>>, vector<8x128xf32>
    %c0_53 = arith.constant 0 : index
    %c0_54 = arith.constant 0 : index
    %168 = vector.load %arg3[%c0_53, %c0_54] : memref<32x128xf32, #tpu.memory_space<vmem>>, vector<32x128xf32>
    %cst_55 = arith.constant dense<0.000000e+00> : vector<8x128xf32>
    %169 = tpu.matmul %135, %168, %cst_55 {dimension_numbers = #tpu.dot_dimension_numbers<[1], [0], [0], [1], [0, 0, 1, 1], [], []>} : vector<8x32xf32>, vector<32x128xf32>, vector<8x128xf32> -> vector<8x128xf32>
    %170 = arith.addf %167, %169 : vector<8x128xf32>
    %171 = vector.extract_strided_slice %170 {offsets = [0, 0], sizes = [8, 96], strides = [1, 1]} : vector<8x128xf32> to vector<8x96xf32>
    %172 = arith.negf %171 : vector<8x96xf32>
    %173 = math.exp %172 : vector<8x96xf32>
    %cst_56 = arith.constant 1.000000e+00 : f32
    %174 = vector.broadcast %cst_56 : f32 to vector<8x96xf32>
    %175 = arith.addf %174, %173 : vector<8x96xf32>
    %176 = arith.divf %174, %175 : vector<8x96xf32>
    %177 = vector.extract_strided_slice %170 {offsets = [0, 96], sizes = [8, 32], strides = [1, 1]} : vector<8x128xf32> to vector<8x32xf32>
    %178 = math.tanh %177 : vector<8x32xf32>
    %179 = vector.extract_strided_slice %176 {offsets = [0, 32], sizes = [8, 32], strides = [1, 1]} : vector<8x96xf32> to vector<8x32xf32>
    %180 = arith.mulf %179, %132 : vector<8x32xf32>
    %181 = vector.extract_strided_slice %176 {offsets = [0, 0], sizes = [8, 32], strides = [1, 1]} : vector<8x96xf32> to vector<8x32xf32>
    %182 = arith.mulf %181, %178 : vector<8x32xf32>
    %183 = arith.addf %180, %182 : vector<8x32xf32>
    %184 = vector.extract_strided_slice %176 {offsets = [0, 64], sizes = [8, 32], strides = [1, 1]} : vector<8x96xf32> to vector<8x32xf32>
    %185 = math.tanh %183 : vector<8x32xf32>
    %186 = arith.mulf %184, %185 : vector<8x32xf32>
    %187 = arith.index_cast %162 : i32 to index
    %c0_57 = arith.constant 0 : index
    %188 = vector.load %arg9[%187, %c0_57] : memref<64x64xf32, #tpu.memory_space<vmem>>, vector<8x32xf32>
    tpu.vector_store %arg9[%187, %c0_57], %186 {strides = array<i32>} : memref<64x64xf32, #tpu.memory_space<vmem>>, vector<8x32xf32>,
    %189 = arith.index_cast %165 : i32 to index
    %c128_58 = arith.constant 128 : index
    %190 = vector.load %arg8[%189, %c128_58] : memref<64x256xf32, #tpu.memory_space<vmem>>, vector<8x128xf32>
    %c0_59 = arith.constant 0 : index
    %c0_60 = arith.constant 0 : index
    %191 = vector.load %arg4[%c0_59, %c0_60] : memref<32x128xf32, #tpu.memory_space<vmem>>, vector<32x128xf32>
    %cst_61 = arith.constant dense<0.000000e+00> : vector<8x128xf32>
    %192 = tpu.matmul %158, %191, %cst_61 {dimension_numbers = #tpu.dot_dimension_numbers<[1], [0], [0], [1], [0, 0, 1, 1], [], []>} : vector<8x32xf32>, vector<32x128xf32>, vector<8x128xf32> -> vector<8x128xf32>
    %193 = arith.addf %190, %192 : vector<8x128xf32>
    %194 = vector.extract_strided_slice %193 {offsets = [0, 0], sizes = [8, 96], strides = [1, 1]} : vector<8x128xf32> to vector<8x96xf32>
    %195 = arith.negf %194 : vector<8x96xf32>
    %196 = math.exp %195 : vector<8x96xf32>
    %cst_62 = arith.constant 1.000000e+00 : f32
    %197 = vector.broadcast %cst_62 : f32 to vector<8x96xf32>
    %198 = arith.addf %197, %196 : vector<8x96xf32>
    %199 = arith.divf %197, %198 : vector<8x96xf32>
    %200 = vector.extract_strided_slice %193 {offsets = [0, 96], sizes = [8, 32], strides = [1, 1]} : vector<8x128xf32> to vector<8x32xf32>
    %201 = math.tanh %200 : vector<8x32xf32>
    %202 = vector.extract_strided_slice %199 {offsets = [0, 32], sizes = [8, 32], strides = [1, 1]} : vector<8x96xf32> to vector<8x32xf32>
    %203 = arith.mulf %202, %155 : vector<8x32xf32>
    %204 = vector.extract_strided_slice %199 {offsets = [0, 0], sizes = [8, 32], strides = [1, 1]} : vector<8x96xf32> to vector<8x32xf32>
    %205 = arith.mulf %204, %201 : vector<8x32xf32>
    %206 = arith.addf %203, %205 : vector<8x32xf32>
    %207 = vector.extract_strided_slice %199 {offsets = [0, 64], sizes = [8, 32], strides = [1, 1]} : vector<8x96xf32> to vector<8x32xf32>
    %208 = math.tanh %206 : vector<8x32xf32>
    %209 = arith.mulf %207, %208 : vector<8x32xf32>
    %210 = arith.index_cast %165 : i32 to index
    %c32_63 = arith.constant 32 : index
    %211 = vector.load %arg9[%210, %c32_63] : memref<64x64xf32, #tpu.memory_space<vmem>>, vector<8x32xf32>
    tpu.vector_store %arg9[%210, %c32_63], %209 {strides = array<i32>} : memref<64x64xf32, #tpu.memory_space<vmem>>, vector<8x32xf32>,
    %c4_i32 = arith.constant 4 : i32
    %c8_i32_64 = arith.constant 8 : i32
    %212 = arith.muli %c4_i32, %c8_i32_64 : i32
    %213 = tpu.assume_multiple %212, 8 : i32
    %c7_i32_65 = arith.constant 7 : i32
    %214 = arith.subi %c7_i32_65, %c4_i32 : i32
    %c8_i32_66 = arith.constant 8 : i32
    %215 = arith.muli %214, %c8_i32_66 : i32
    %216 = tpu.assume_multiple %215, 8 : i32
    %217 = arith.index_cast %213 : i32 to index
    %c0_67 = arith.constant 0 : index
    %218 = vector.load %arg8[%217, %c0_67] : memref<64x256xf32, #tpu.memory_space<vmem>>, vector<8x128xf32>
    %c0_68 = arith.constant 0 : index
    %c0_69 = arith.constant 0 : index
    %219 = vector.load %arg3[%c0_68, %c0_69] : memref<32x128xf32, #tpu.memory_space<vmem>>, vector<32x128xf32>
    %cst_70 = arith.constant dense<0.000000e+00> : vector<8x128xf32>
    %220 = tpu.matmul %186, %219, %cst_70 {dimension_numbers = #tpu.dot_dimension_numbers<[1], [0], [0], [1], [0, 0, 1, 1], [], []>} : vector<8x32xf32>, vector<32x128xf32>, vector<8x128xf32> -> vector<8x128xf32>
    %221 = arith.addf %218, %220 : vector<8x128xf32>
    %222 = vector.extract_strided_slice %221 {offsets = [0, 0], sizes = [8, 96], strides = [1, 1]} : vector<8x128xf32> to vector<8x96xf32>
    %223 = arith.negf %222 : vector<8x96xf32>
    %224 = math.exp %223 : vector<8x96xf32>
    %cst_71 = arith.constant 1.000000e+00 : f32
    %225 = vector.broadcast %cst_71 : f32 to vector<8x96xf32>
    %226 = arith.addf %225, %224 : vector<8x96xf32>
    %227 = arith.divf %225, %226 : vector<8x96xf32>
    %228 = vector.extract_strided_slice %221 {offsets = [0, 96], sizes = [8, 32], strides = [1, 1]} : vector<8x128xf32> to vector<8x32xf32>
    %229 = math.tanh %228 : vector<8x32xf32>
    %230 = vector.extract_strided_slice %227 {offsets = [0, 32], sizes = [8, 32], strides = [1, 1]} : vector<8x96xf32> to vector<8x32xf32>
    %231 = arith.mulf %230, %183 : vector<8x32xf32>
    %232 = vector.extract_strided_slice %227 {offsets = [0, 0], sizes = [8, 32], strides = [1, 1]} : vector<8x96xf32> to vector<8x32xf32>
    %233 = arith.mulf %232, %229 : vector<8x32xf32>
    %234 = arith.addf %231, %233 : vector<8x32xf32>
    %235 = vector.extract_strided_slice %227 {offsets = [0, 64], sizes = [8, 32], strides = [1, 1]} : vector<8x96xf32> to vector<8x32xf32>
    %236 = math.tanh %234 : vector<8x32xf32>
    %237 = arith.mulf %235, %236 : vector<8x32xf32>
    %238 = arith.index_cast %213 : i32 to index
    %c0_72 = arith.constant 0 : index
    %239 = vector.load %arg9[%238, %c0_72] : memref<64x64xf32, #tpu.memory_space<vmem>>, vector<8x32xf32>
    tpu.vector_store %arg9[%238, %c0_72], %237 {strides = array<i32>} : memref<64x64xf32, #tpu.memory_space<vmem>>, vector<8x32xf32>,
    %240 = arith.index_cast %216 : i32 to index
    %c128_73 = arith.constant 128 : index
    %241 = vector.load %arg8[%240, %c128_73] : memref<64x256xf32, #tpu.memory_space<vmem>>, vector<8x128xf32>
    %c0_74 = arith.constant 0 : index
    %c0_75 = arith.constant 0 : index
    %242 = vector.load %arg4[%c0_74, %c0_75] : memref<32x128xf32, #tpu.memory_space<vmem>>, vector<32x128xf32>
    %cst_76 = arith.constant dense<0.000000e+00> : vector<8x128xf32>
    %243 = tpu.matmul %209, %242, %cst_76 {dimension_numbers = #tpu.dot_dimension_numbers<[1], [0], [0], [1], [0, 0, 1, 1], [], []>} : vector<8x32xf32>, vector<32x128xf32>, vector<8x128xf32> -> vector<8x128xf32>
    %244 = arith.addf %241, %243 : vector<8x128xf32>
    %245 = vector.extract_strided_slice %244 {offsets = [0, 0], sizes = [8, 96], strides = [1, 1]} : vector<8x128xf32> to vector<8x96xf32>
    %246 = arith.negf %245 : vector<8x96xf32>
    %247 = math.exp %246 : vector<8x96xf32>
    %cst_77 = arith.constant 1.000000e+00 : f32
    %248 = vector.broadcast %cst_77 : f32 to vector<8x96xf32>
    %249 = arith.addf %248, %247 : vector<8x96xf32>
    %250 = arith.divf %248, %249 : vector<8x96xf32>
    %251 = vector.extract_strided_slice %244 {offsets = [0, 96], sizes = [8, 32], strides = [1, 1]} : vector<8x128xf32> to vector<8x32xf32>
    %252 = math.tanh %251 : vector<8x32xf32>
    %253 = vector.extract_strided_slice %250 {offsets = [0, 32], sizes = [8, 32], strides = [1, 1]} : vector<8x96xf32> to vector<8x32xf32>
    %254 = arith.mulf %253, %206 : vector<8x32xf32>
    %255 = vector.extract_strided_slice %250 {offsets = [0, 0], sizes = [8, 32], strides = [1, 1]} : vector<8x96xf32> to vector<8x32xf32>
    %256 = arith.mulf %255, %252 : vector<8x32xf32>
    %257 = arith.addf %254, %256 : vector<8x32xf32>
    %258 = vector.extract_strided_slice %250 {offsets = [0, 64], sizes = [8, 32], strides = [1, 1]} : vector<8x96xf32> to vector<8x32xf32>
    %259 = math.tanh %257 : vector<8x32xf32>
    %260 = arith.mulf %258, %259 : vector<8x32xf32>
    %261 = arith.index_cast %216 : i32 to index
    %c32_78 = arith.constant 32 : index
    %262 = vector.load %arg9[%261, %c32_78] : memref<64x64xf32, #tpu.memory_space<vmem>>, vector<8x32xf32>
    tpu.vector_store %arg9[%261, %c32_78], %260 {strides = array<i32>} : memref<64x64xf32, #tpu.memory_space<vmem>>, vector<8x32xf32>,
    %c5_i32 = arith.constant 5 : i32
    %c8_i32_79 = arith.constant 8 : i32
    %263 = arith.muli %c5_i32, %c8_i32_79 : i32
    %264 = tpu.assume_multiple %263, 8 : i32
    %c7_i32_80 = arith.constant 7 : i32
    %265 = arith.subi %c7_i32_80, %c5_i32 : i32
    %c8_i32_81 = arith.constant 8 : i32
    %266 = arith.muli %265, %c8_i32_81 : i32
    %267 = tpu.assume_multiple %266, 8 : i32
    %268 = arith.index_cast %264 : i32 to index
    %c0_82 = arith.constant 0 : index
    %269 = vector.load %arg8[%268, %c0_82] : memref<64x256xf32, #tpu.memory_space<vmem>>, vector<8x128xf32>
    %c0_83 = arith.constant 0 : index
    %c0_84 = arith.constant 0 : index
    %270 = vector.load %arg3[%c0_83, %c0_84] : memref<32x128xf32, #tpu.memory_space<vmem>>, vector<32x128xf32>
    %cst_85 = arith.constant dense<0.000000e+00> : vector<8x128xf32>
    %271 = tpu.matmul %237, %270, %cst_85 {dimension_numbers = #tpu.dot_dimension_numbers<[1], [0], [0], [1], [0, 0, 1, 1], [], []>} : vector<8x32xf32>, vector<32x128xf32>, vector<8x128xf32> -> vector<8x128xf32>
    %272 = arith.addf %269, %271 : vector<8x128xf32>
    %273 = vector.extract_strided_slice %272 {offsets = [0, 0], sizes = [8, 96], strides = [1, 1]} : vector<8x128xf32> to vector<8x96xf32>
    %274 = arith.negf %273 : vector<8x96xf32>
    %275 = math.exp %274 : vector<8x96xf32>
    %cst_86 = arith.constant 1.000000e+00 : f32
    %276 = vector.broadcast %cst_86 : f32 to vector<8x96xf32>
    %277 = arith.addf %276, %275 : vector<8x96xf32>
    %278 = arith.divf %276, %277 : vector<8x96xf32>
    %279 = vector.extract_strided_slice %272 {offsets = [0, 96], sizes = [8, 32], strides = [1, 1]} : vector<8x128xf32> to vector<8x32xf32>
    %280 = math.tanh %279 : vector<8x32xf32>
    %281 = vector.extract_strided_slice %278 {offsets = [0, 32], sizes = [8, 32], strides = [1, 1]} : vector<8x96xf32> to vector<8x32xf32>
    %282 = arith.mulf %281, %234 : vector<8x32xf32>
    %283 = vector.extract_strided_slice %278 {offsets = [0, 0], sizes = [8, 32], strides = [1, 1]} : vector<8x96xf32> to vector<8x32xf32>
    %284 = arith.mulf %283, %280 : vector<8x32xf32>
    %285 = arith.addf %282, %284 : vector<8x32xf32>
    %286 = vector.extract_strided_slice %278 {offsets = [0, 64], sizes = [8, 32], strides = [1, 1]} : vector<8x96xf32> to vector<8x32xf32>
    %287 = math.tanh %285 : vector<8x32xf32>
    %288 = arith.mulf %286, %287 : vector<8x32xf32>
    %289 = arith.index_cast %264 : i32 to index
    %c0_87 = arith.constant 0 : index
    %290 = vector.load %arg9[%289, %c0_87] : memref<64x64xf32, #tpu.memory_space<vmem>>, vector<8x32xf32>
    tpu.vector_store %arg9[%289, %c0_87], %288 {strides = array<i32>} : memref<64x64xf32, #tpu.memory_space<vmem>>, vector<8x32xf32>,
    %291 = arith.index_cast %267 : i32 to index
    %c128_88 = arith.constant 128 : index
    %292 = vector.load %arg8[%291, %c128_88] : memref<64x256xf32, #tpu.memory_space<vmem>>, vector<8x128xf32>
    %c0_89 = arith.constant 0 : index
    %c0_90 = arith.constant 0 : index
    %293 = vector.load %arg4[%c0_89, %c0_90] : memref<32x128xf32, #tpu.memory_space<vmem>>, vector<32x128xf32>
    %cst_91 = arith.constant dense<0.000000e+00> : vector<8x128xf32>
    %294 = tpu.matmul %260, %293, %cst_91 {dimension_numbers = #tpu.dot_dimension_numbers<[1], [0], [0], [1], [0, 0, 1, 1], [], []>} : vector<8x32xf32>, vector<32x128xf32>, vector<8x128xf32> -> vector<8x128xf32>
    %295 = arith.addf %292, %294 : vector<8x128xf32>
    %296 = vector.extract_strided_slice %295 {offsets = [0, 0], sizes = [8, 96], strides = [1, 1]} : vector<8x128xf32> to vector<8x96xf32>
    %297 = arith.negf %296 : vector<8x96xf32>
    %298 = math.exp %297 : vector<8x96xf32>
    %cst_92 = arith.constant 1.000000e+00 : f32
    %299 = vector.broadcast %cst_92 : f32 to vector<8x96xf32>
    %300 = arith.addf %299, %298 : vector<8x96xf32>
    %301 = arith.divf %299, %300 : vector<8x96xf32>
    %302 = vector.extract_strided_slice %295 {offsets = [0, 96], sizes = [8, 32], strides = [1, 1]} : vector<8x128xf32> to vector<8x32xf32>
    %303 = math.tanh %302 : vector<8x32xf32>
    %304 = vector.extract_strided_slice %301 {offsets = [0, 32], sizes = [8, 32], strides = [1, 1]} : vector<8x96xf32> to vector<8x32xf32>
    %305 = arith.mulf %304, %257 : vector<8x32xf32>
    %306 = vector.extract_strided_slice %301 {offsets = [0, 0], sizes = [8, 32], strides = [1, 1]} : vector<8x96xf32> to vector<8x32xf32>
    %307 = arith.mulf %306, %303 : vector<8x32xf32>
    %308 = arith.addf %305, %307 : vector<8x32xf32>
    %309 = vector.extract_strided_slice %301 {offsets = [0, 64], sizes = [8, 32], strides = [1, 1]} : vector<8x96xf32> to vector<8x32xf32>
    %310 = math.tanh %308 : vector<8x32xf32>
    %311 = arith.mulf %309, %310 : vector<8x32xf32>
    %312 = arith.index_cast %267 : i32 to index
    %c32_93 = arith.constant 32 : index
    %313 = vector.load %arg9[%312, %c32_93] : memref<64x64xf32, #tpu.memory_space<vmem>>, vector<8x32xf32>
    tpu.vector_store %arg9[%312, %c32_93], %311 {strides = array<i32>} : memref<64x64xf32, #tpu.memory_space<vmem>>, vector<8x32xf32>,
    %c6_i32 = arith.constant 6 : i32
    %c8_i32_94 = arith.constant 8 : i32
    %314 = arith.muli %c6_i32, %c8_i32_94 : i32
    %315 = tpu.assume_multiple %314, 8 : i32
    %c7_i32_95 = arith.constant 7 : i32
    %316 = arith.subi %c7_i32_95, %c6_i32 : i32
    %c8_i32_96 = arith.constant 8 : i32
    %317 = arith.muli %316, %c8_i32_96 : i32
    %318 = tpu.assume_multiple %317, 8 : i32
    %319 = arith.index_cast %315 : i32 to index
    %c0_97 = arith.constant 0 : index
    %320 = vector.load %arg8[%319, %c0_97] : memref<64x256xf32, #tpu.memory_space<vmem>>, vector<8x128xf32>
    %c0_98 = arith.constant 0 : index
    %c0_99 = arith.constant 0 : index
    %321 = vector.load %arg3[%c0_98, %c0_99] : memref<32x128xf32, #tpu.memory_space<vmem>>, vector<32x128xf32>
    %cst_100 = arith.constant dense<0.000000e+00> : vector<8x128xf32>
    %322 = tpu.matmul %288, %321, %cst_100 {dimension_numbers = #tpu.dot_dimension_numbers<[1], [0], [0], [1], [0, 0, 1, 1], [], []>} : vector<8x32xf32>, vector<32x128xf32>, vector<8x128xf32> -> vector<8x128xf32>
    %323 = arith.addf %320, %322 : vector<8x128xf32>
    %324 = vector.extract_strided_slice %323 {offsets = [0, 0], sizes = [8, 96], strides = [1, 1]} : vector<8x128xf32> to vector<8x96xf32>
    %325 = arith.negf %324 : vector<8x96xf32>
    %326 = math.exp %325 : vector<8x96xf32>
    %cst_101 = arith.constant 1.000000e+00 : f32
    %327 = vector.broadcast %cst_101 : f32 to vector<8x96xf32>
    %328 = arith.addf %327, %326 : vector<8x96xf32>
    %329 = arith.divf %327, %328 : vector<8x96xf32>
    %330 = vector.extract_strided_slice %323 {offsets = [0, 96], sizes = [8, 32], strides = [1, 1]} : vector<8x128xf32> to vector<8x32xf32>
    %331 = math.tanh %330 : vector<8x32xf32>
    %332 = vector.extract_strided_slice %329 {offsets = [0, 32], sizes = [8, 32], strides = [1, 1]} : vector<8x96xf32> to vector<8x32xf32>
    %333 = arith.mulf %332, %285 : vector<8x32xf32>
    %334 = vector.extract_strided_slice %329 {offsets = [0, 0], sizes = [8, 32], strides = [1, 1]} : vector<8x96xf32> to vector<8x32xf32>
    %335 = arith.mulf %334, %331 : vector<8x32xf32>
    %336 = arith.addf %333, %335 : vector<8x32xf32>
    %337 = vector.extract_strided_slice %329 {offsets = [0, 64], sizes = [8, 32], strides = [1, 1]} : vector<8x96xf32> to vector<8x32xf32>
    %338 = math.tanh %336 : vector<8x32xf32>
    %339 = arith.mulf %337, %338 : vector<8x32xf32>
    %340 = arith.index_cast %315 : i32 to index
    %c0_102 = arith.constant 0 : index
    %341 = vector.load %arg9[%340, %c0_102] : memref<64x64xf32, #tpu.memory_space<vmem>>, vector<8x32xf32>
    tpu.vector_store %arg9[%340, %c0_102], %339 {strides = array<i32>} : memref<64x64xf32, #tpu.memory_space<vmem>>, vector<8x32xf32>,
    %342 = arith.index_cast %318 : i32 to index
    %c128_103 = arith.constant 128 : index
    %343 = vector.load %arg8[%342, %c128_103] : memref<64x256xf32, #tpu.memory_space<vmem>>, vector<8x128xf32>
    %c0_104 = arith.constant 0 : index
    %c0_105 = arith.constant 0 : index
    %344 = vector.load %arg4[%c0_104, %c0_105] : memref<32x128xf32, #tpu.memory_space<vmem>>, vector<32x128xf32>
    %cst_106 = arith.constant dense<0.000000e+00> : vector<8x128xf32>
    %345 = tpu.matmul %311, %344, %cst_106 {dimension_numbers = #tpu.dot_dimension_numbers<[1], [0], [0], [1], [0, 0, 1, 1], [], []>} : vector<8x32xf32>, vector<32x128xf32>, vector<8x128xf32> -> vector<8x128xf32>
    %346 = arith.addf %343, %345 : vector<8x128xf32>
    %347 = vector.extract_strided_slice %346 {offsets = [0, 0], sizes = [8, 96], strides = [1, 1]} : vector<8x128xf32> to vector<8x96xf32>
    %348 = arith.negf %347 : vector<8x96xf32>
    %349 = math.exp %348 : vector<8x96xf32>
    %cst_107 = arith.constant 1.000000e+00 : f32
    %350 = vector.broadcast %cst_107 : f32 to vector<8x96xf32>
    %351 = arith.addf %350, %349 : vector<8x96xf32>
    %352 = arith.divf %350, %351 : vector<8x96xf32>
    %353 = vector.extract_strided_slice %346 {offsets = [0, 96], sizes = [8, 32], strides = [1, 1]} : vector<8x128xf32> to vector<8x32xf32>
    %354 = math.tanh %353 : vector<8x32xf32>
    %355 = vector.extract_strided_slice %352 {offsets = [0, 32], sizes = [8, 32], strides = [1, 1]} : vector<8x96xf32> to vector<8x32xf32>
    %356 = arith.mulf %355, %308 : vector<8x32xf32>
    %357 = vector.extract_strided_slice %352 {offsets = [0, 0], sizes = [8, 32], strides = [1, 1]} : vector<8x96xf32> to vector<8x32xf32>
    %358 = arith.mulf %357, %354 : vector<8x32xf32>
    %359 = arith.addf %356, %358 : vector<8x32xf32>
    %360 = vector.extract_strided_slice %352 {offsets = [0, 64], sizes = [8, 32], strides = [1, 1]} : vector<8x96xf32> to vector<8x32xf32>
    %361 = math.tanh %359 : vector<8x32xf32>
    %362 = arith.mulf %360, %361 : vector<8x32xf32>
    %363 = arith.index_cast %318 : i32 to index
    %c32_108 = arith.constant 32 : index
    %364 = vector.load %arg9[%363, %c32_108] : memref<64x64xf32, #tpu.memory_space<vmem>>, vector<8x32xf32>
    tpu.vector_store %arg9[%363, %c32_108], %362 {strides = array<i32>} : memref<64x64xf32, #tpu.memory_space<vmem>>, vector<8x32xf32>,
    %c7_i32_109 = arith.constant 7 : i32
    %c8_i32_110 = arith.constant 8 : i32
    %365 = arith.muli %c7_i32_109, %c8_i32_110 : i32
    %366 = tpu.assume_multiple %365, 8 : i32
    %c7_i32_111 = arith.constant 7 : i32
    %367 = arith.subi %c7_i32_111, %c7_i32_109 : i32
    %c8_i32_112 = arith.constant 8 : i32
    %368 = arith.muli %367, %c8_i32_112 : i32
    %369 = tpu.assume_multiple %368, 8 : i32
    %370 = arith.index_cast %366 : i32 to index
    %c0_113 = arith.constant 0 : index
    %371 = vector.load %arg8[%370, %c0_113] : memref<64x256xf32, #tpu.memory_space<vmem>>, vector<8x128xf32>
    %c0_114 = arith.constant 0 : index
    %c0_115 = arith.constant 0 : index
    %372 = vector.load %arg3[%c0_114, %c0_115] : memref<32x128xf32, #tpu.memory_space<vmem>>, vector<32x128xf32>
    %cst_116 = arith.constant dense<0.000000e+00> : vector<8x128xf32>
    %373 = tpu.matmul %339, %372, %cst_116 {dimension_numbers = #tpu.dot_dimension_numbers<[1], [0], [0], [1], [0, 0, 1, 1], [], []>} : vector<8x32xf32>, vector<32x128xf32>, vector<8x128xf32> -> vector<8x128xf32>
    %374 = arith.addf %371, %373 : vector<8x128xf32>
    %375 = vector.extract_strided_slice %374 {offsets = [0, 0], sizes = [8, 96], strides = [1, 1]} : vector<8x128xf32> to vector<8x96xf32>
    %376 = arith.negf %375 : vector<8x96xf32>
    %377 = math.exp %376 : vector<8x96xf32>
    %cst_117 = arith.constant 1.000000e+00 : f32
    %378 = vector.broadcast %cst_117 : f32 to vector<8x96xf32>
    %379 = arith.addf %378, %377 : vector<8x96xf32>
    %380 = arith.divf %378, %379 : vector<8x96xf32>
    %381 = vector.extract_strided_slice %374 {offsets = [0, 96], sizes = [8, 32], strides = [1, 1]} : vector<8x128xf32> to vector<8x32xf32>
    %382 = math.tanh %381 : vector<8x32xf32>
    %383 = vector.extract_strided_slice %380 {offsets = [0, 32], sizes = [8, 32], strides = [1, 1]} : vector<8x96xf32> to vector<8x32xf32>
    %384 = arith.mulf %383, %336 : vector<8x32xf32>
    %385 = vector.extract_strided_slice %380 {offsets = [0, 0], sizes = [8, 32], strides = [1, 1]} : vector<8x96xf32> to vector<8x32xf32>
    %386 = arith.mulf %385, %382 : vector<8x32xf32>
    %387 = arith.addf %384, %386 : vector<8x32xf32>
    %388 = vector.extract_strided_slice %380 {offsets = [0, 64], sizes = [8, 32], strides = [1, 1]} : vector<8x96xf32> to vector<8x32xf32>
    %389 = math.tanh %387 : vector<8x32xf32>
    %390 = arith.mulf %388, %389 : vector<8x32xf32>
    %391 = arith.index_cast %366 : i32 to index
    %c0_118 = arith.constant 0 : index
    %392 = vector.load %arg9[%391, %c0_118] : memref<64x64xf32, #tpu.memory_space<vmem>>, vector<8x32xf32>
    tpu.vector_store %arg9[%391, %c0_118], %390 {strides = array<i32>} : memref<64x64xf32, #tpu.memory_space<vmem>>, vector<8x32xf32>,
    %393 = arith.index_cast %369 : i32 to index
    %c128_119 = arith.constant 128 : index
    %394 = vector.load %arg8[%393, %c128_119] : memref<64x256xf32, #tpu.memory_space<vmem>>, vector<8x128xf32>
    %c0_120 = arith.constant 0 : index
    %c0_121 = arith.constant 0 : index
    %395 = vector.load %arg4[%c0_120, %c0_121] : memref<32x128xf32, #tpu.memory_space<vmem>>, vector<32x128xf32>
    %cst_122 = arith.constant dense<0.000000e+00> : vector<8x128xf32>
    %396 = tpu.matmul %362, %395, %cst_122 {dimension_numbers = #tpu.dot_dimension_numbers<[1], [0], [0], [1], [0, 0, 1, 1], [], []>} : vector<8x32xf32>, vector<32x128xf32>, vector<8x128xf32> -> vector<8x128xf32>
    %397 = arith.addf %394, %396 : vector<8x128xf32>
    %398 = vector.extract_strided_slice %397 {offsets = [0, 0], sizes = [8, 96], strides = [1, 1]} : vector<8x128xf32> to vector<8x96xf32>
    %399 = arith.negf %398 : vector<8x96xf32>
    %400 = math.exp %399 : vector<8x96xf32>
    %cst_123 = arith.constant 1.000000e+00 : f32
    %401 = vector.broadcast %cst_123 : f32 to vector<8x96xf32>
    %402 = arith.addf %401, %400 : vector<8x96xf32>
    %403 = arith.divf %401, %402 : vector<8x96xf32>
    %404 = vector.extract_strided_slice %397 {offsets = [0, 96], sizes = [8, 32], strides = [1, 1]} : vector<8x128xf32> to vector<8x32xf32>
    %405 = math.tanh %404 : vector<8x32xf32>
    %406 = vector.extract_strided_slice %403 {offsets = [0, 32], sizes = [8, 32], strides = [1, 1]} : vector<8x96xf32> to vector<8x32xf32>
    %407 = arith.mulf %406, %359 : vector<8x32xf32>
    %408 = vector.extract_strided_slice %403 {offsets = [0, 0], sizes = [8, 32], strides = [1, 1]} : vector<8x96xf32> to vector<8x32xf32>
    %409 = arith.mulf %408, %405 : vector<8x32xf32>
    %410 = arith.addf %407, %409 : vector<8x32xf32>
    %411 = vector.extract_strided_slice %403 {offsets = [0, 64], sizes = [8, 32], strides = [1, 1]} : vector<8x96xf32> to vector<8x32xf32>
    %412 = math.tanh %410 : vector<8x32xf32>
    %413 = arith.mulf %411, %412 : vector<8x32xf32>
    %414 = arith.index_cast %369 : i32 to index
    %c32_124 = arith.constant 32 : index
    %415 = vector.load %arg9[%414, %c32_124] : memref<64x64xf32, #tpu.memory_space<vmem>>, vector<8x32xf32>
    tpu.vector_store %arg9[%414, %c32_124], %413 {strides = array<i32>} : memref<64x64xf32, #tpu.memory_space<vmem>>, vector<8x32xf32>,
    %c8_i32_125 = arith.constant 8 : i32
    %c0_126 = arith.constant 0 : index
    %c0_127 = arith.constant 0 : index
    %416 = vector.load %arg9[%c0_126, %c0_127] : memref<64x64xf32, #tpu.memory_space<vmem>>, vector<64x64xf32>
    %c0_128 = arith.constant 0 : index
    %c0_129 = arith.constant 0 : index
    %417 = vector.load %arg5[%c0_128, %c0_129] : memref<64x128xf32, #tpu.memory_space<vmem>>, vector<64x128xf32>
    %cst_130 = arith.constant dense<0.000000e+00> : vector<64x128xf32>
    %418 = tpu.matmul %416, %417, %cst_130 {dimension_numbers = #tpu.dot_dimension_numbers<[1], [0], [0], [1], [0, 0, 1, 1], [], []>} : vector<64x64xf32>, vector<64x128xf32>, vector<64x128xf32> -> vector<64x128xf32>
    %c0_131 = arith.constant 0 : index
    %c0_132 = arith.constant 0 : index
    %419 = vector.load %arg6[%c0_131, %c0_132] : memref<1x128xf32, #tpu.memory_space<vmem>>, vector<1x128xf32>
    %420 = vector.broadcast %419 : vector<1x128xf32> to vector<64x128xf32>
    %421 = arith.addf %418, %420 : vector<64x128xf32>
    %c0_133 = arith.constant 0 : index
    %c0_134 = arith.constant 0 : index
    %422 = vector.load %arg7[%c0_133, %c0_134] : memref<64x128xf32, #tpu.memory_space<vmem>>, vector<64x128xf32>
    tpu.vector_store %arg7[%c0_133, %c0_134], %421 {strides = array<i32>} : memref<64x128xf32, #tpu.memory_space<vmem>>, vector<64x128xf32>,
    return
  }
}

</mosaic_0001>

<llo_original>
// kernel: tpu_custom_call.1
$region0: #{tpu_custom_call.1}
  #allocation0 [shape = 'u32[]', space=smem, size = 0x4, offset = 0x4, fixed_abs, tag = 'smem constant byte address 0x4 - core index']
  #allocation1 [shape = 'u32[144,128]{1,0:T(1,128)}', space=vmem, size = 0x12000, scoped, tag = 'internal scratch']
  #allocation2 [shape = 'f32[64,256]{1,0:T(8,128)}', space=vmem, size = 0x10000, scoped, tag = 'scratch operand']
  #allocation3 [shape = 'f32[64,64]{1,0:T(8,128)}', space=vmem, size = 0x8000, scoped, tag = 'scratch operand']
  %s0 = inlined_call_operand.vmem [shape: f32[64,32], index: 0, kind: input, shape index: {}]
  %s1 = inlined_call_operand.vmem [shape: f32[32,256], index: 1, kind: input, shape index: {}]
  %s2 = inlined_call_operand.vmem [shape: f32[1,256], index: 2, kind: input, shape index: {}]
  %s3 = inlined_call_operand.vmem [shape: f32[32,128], index: 3, kind: input, shape index: {}]
  %s4 = inlined_call_operand.hbm [shape: f32[32,128], index: 4, kind: input, shape index: {}]
  %s5 = inlined_call_operand.hbm [shape: f32[64,128], index: 5, kind: input, shape index: {}]
  %s6 = inlined_call_operand.vmem [shape: f32[1,128], index: 6, kind: input, shape index: {}]
  %s7 = inlined_call_operand.hbm [shape: f32[64,128], index: 7, kind: output, shape index: {}]
  %s8 = sld [smem:[#allocation0]]
  $region46: #{tpu_custom_call.1} parent=0
    _
  %s10 = ssub.s32 1, %s8
  %s11 = scalar_select 0, %s10, %s8
  $region1: #{tpu_custom_call.1} parent=0
    #allocation4 [shape = 'u8[16384]{0}', space=vmem, size = 0x4000, scoped, tag = 'input window, operand 4, single buffered']
    #allocation5 [shape = 's32[1]{0}', space=sflag, size = 0x4, scoped, tag = 'scoped memory for tpu_custom_call.1']
    #allocation6 [shape = 's32[1]{0}', space=sflag, size = 0x4, scoped, tag = 'scoped memory for tpu_custom_call.1']
    #allocation7 [shape = 'u8[32768]{0}', space=vmem, size = 0x8000, scoped, tag = 'input window, operand 5, single buffered']
    #allocation8 [shape = 's32[1]{0}', space=sflag, size = 0x4, scoped, tag = 'scoped memory for tpu_custom_call.1']
    #allocation9 [shape = 'u8[32768]{0}', space=vmem, size = 0x8000, scoped, tag = 'output window, operand 0, single buffered']
    %12 = vsyncpa [#allocation5], 0
    %13 = vsyncpa [#allocation8], 0
    %14 = vsyncpa [#allocation6], 0
    // Predicated region
    $region2: #{tpu_custom_call.1} parent=1 // pred_check
      _
    $region3: #{tpu_custom_call.1} parent=1 // pred_check_branch
      %16 = sbr.rel (0) target = $region5
    $region4: #{tpu_custom_call.1} parent=1 // pred_region
      _
    $region5: #{tpu_custom_call.1} parent=1 // pred_fallthru
      _
    // Predicated region
    $region6: #{tpu_custom_call.1} parent=1 // pred_check
      _
    $region7: #{tpu_custom_call.1} parent=1 // pred_check_branch
      %18 = sbr.rel (0) target = $region9
    $region8: #{tpu_custom_call.1} parent=1 // pred_region
      _
    $region9: #{tpu_custom_call.1} parent=1 // pred_fallthru
      _
    // Predicated region
    $region10: #{tpu_custom_call.1} parent=1 // pred_check
      _
    $region11: #{tpu_custom_call.1} parent=1 // pred_check_branch
      %20 = sbr.rel (0) target = $region13
    $region12: #{tpu_custom_call.1} parent=1 // pred_region
      _
    $region13: #{tpu_custom_call.1} parent=1 // pred_fallthru
      _
    // Predicated region
    $region14: #{tpu_custom_call.1} parent=1 // pred_check
      _
    $region15: #{tpu_custom_call.1} parent=1 // pred_check_branch
      %22 = sbr.rel (0) target = $region17
    $region16: #{tpu_custom_call.1} parent=1 // pred_region
      _
    $region17: #{tpu_custom_call.1} parent=1 // pred_fallthru
      _
    // Predicated region
    $region18: #{tpu_custom_call.1} parent=1 // pred_check
      _
    $region19: #{tpu_custom_call.1} parent=1 // pred_check_branch
      %24 = sbr.rel (0) target = $region21
    $region20: #{tpu_custom_call.1} parent=1 // pred_region
      %s26 = ssub.s32 512, 512
      %27 = vsyncadd [#allocation5], %s26
      %s28 = sshll.u32 [#allocation4], 4
      %s29 = int_to_ptr.vmem [resolvable:$true] %s28
      %34 = dma.hbm_to_vmem [thread:$0]  %s4, 512, %s29, [#allocation5], 128, 128, 8
    $region21: #{tpu_custom_call.1} parent=1 // pred_fallthru
      _
    // Predicated region
    $region22: #{tpu_custom_call.1} parent=1 // pred_check
      _
    $region23: #{tpu_custom_call.1} parent=1 // pred_check_branch
      %36 = sbr.rel (0) target = $region25
    $region24: #{tpu_custom_call.1} parent=1 // pred_region
      %s38 = ssub.s32 1024, 1024
      %39 = vsyncadd [#allocation8], %s38
      %s40 = sshll.u32 [#allocation7], 4
      %s41 = int_to_ptr.vmem [resolvable:$true] %s40
      %46 = dma.hbm_to_vmem [thread:$0]  %s5, 1024, %s41, [#allocation8], 128, 128, 8
    $region25: #{tpu_custom_call.1} parent=1 // pred_fallthru
      _
    // Predicated region
    $region26: #{tpu_custom_call.1} parent=1 // pred_check
      _
    $region27: #{tpu_custom_call.1} parent=1 // pred_check_branch
      %48 = sbr.rel (0) target = $region29
    $region28: #{tpu_custom_call.1} parent=1 // pred_region
      _
    $region29: #{tpu_custom_call.1} parent=1 // pred_fallthru
      _
    // Predicated region
    $region30: #{tpu_custom_call.1} parent=1 // pred_check
      _
    $region31: #{tpu_custom_call.1} parent=1 // pred_check_branch
      %50 = sbr.rel (0) target = $region33
    $region32: #{tpu_custom_call.1} parent=1 // pred_region
      %51 = dma.done [#allocation5], 512
    $region33: #{tpu_custom_call.1} parent=1 // pred_fallthru
      _
    // Predicated region
    $region34: #{tpu_custom_call.1} parent=1 // pred_check
      _
    $region35: #{tpu_custom_call.1} parent=1 // pred_check_branch
      %53 = sbr.rel (0) target = $region37
    $region36: #{tpu_custom_call.1} parent=1 // pred_region
      %54 = dma.done [#allocation8], 1024
    $region37: #{tpu_custom_call.1} parent=1 // pred_fallthru
      _
    %v55 = vld [vmem:[%s0] sm:$0xff]
    %v56 = vld [vmem:[%s0 + $0x8] sm:$0xff]
    %v57 = vld [vmem:[%s0 + $0x10] sm:$0xff]
    %v58 = vld [vmem:[%s0 + $0x18] sm:$0xff]
    %v59 = vld [vmem:[%s0 + $0x20] sm:$0xff]
    %v60 = vld [vmem:[%s0 + $0x28] sm:$0xff]
    %v61 = vld [vmem:[%s0 + $0x30] sm:$0xff]
    %v62 = vld [vmem:[%s0 + $0x38] sm:$0xff]
    %v63 = vld [vmem:[%s1] sm:$0xff]
    %v64 = vld [vmem:[%s1 + $0x8] sm:$0xff]
    %v65 = vld [vmem:[%s1 + $0x10] sm:$0xff]
    %v66 = vld [vmem:[%s1 + $0x18] sm:$0xff]
    %v67 = vld [vmem:[%s1 + $0x20] sm:$0xff]
    %v68 = vld [vmem:[%s1 + $0x28] sm:$0xff]
    %v69 = vld [vmem:[%s1 + $0x30] sm:$0xff]
    %v70 = vld [vmem:[%s1 + $0x38] sm:$0xff]
    %v71 = vld [vmem:[%s2] sm:$0x3]
    %v73 = vlaneseq
    %v74 = vshrl.u32 %v73, 7
    %v75 = vsub.s32 0, %v74
    %v76 = vrot.slane %v71, %v75
    %v77 = vlaneseq
    %v78 = vshrl.u32 %v77, 7
    %v79 = vsub.s32 1, %v78
    %v80 = vrot.slane %v71, %v79
    %vm83 = vcmask 261120
    %v85 = vsel %vm83, %v55, 0
    %v88 = vsel %vm83, %v56, 0
    %v91 = vsel %vm83, %v57, 0
    %v94 = vsel %vm83, %v58, 0
    %v97 = vsel %vm83, %v59, 0
    %v100 = vsel %vm83, %v60, 0
    %v103 = vsel %vm83, %v61, 0
    %v106 = vsel %vm83, %v62, 0
    %108 = vmatprep.subr.mxu0 %v64
    %109 = vmatpush1.msra.mxu0 %v63
    %110 = vmatprep.subr.mxu0 %v66
    %111 = vmatpush1.msra.mxu0 %v65
    %112 = vmatprep.subr.mxu0 %v68
    %113 = vmatpush1.msra.mxu0 %v67
    %114 = vmatprep.subr.mxu0 %v70
    %115 = vmatpush1.msra.mxu0 %v69
    %116 = vmatprep.subr.mxu0 0.0
    %117 = vmatpush1.msra.mxu0 0.0
    %118 = vmatprep.subr.mxu0 0.0
    %119 = vmatpush1.msra.mxu0 0.0
    %120 = vmatprep.subr.mxu0 0.0
    %121 = vmatpush1.msra.mxu0 0.0
    %122 = vmatprep.subr.mxu0 0.0
    %123 = vmatpush1.msra.mxu0 0.0
    %124 = vmatprep.subr.mxu0 0.0
    %125 = vmatpush1.msra.mxu0 0.0
    %126 = vmatprep.subr.mxu0 0.0
    %127 = vmatpush1.msra.mxu0 0.0
    %128 = vmatprep.subr.mxu0 0.0
    %129 = vmatpush1.msra.mxu0 0.0
    %130 = vmatprep.subr.mxu0 0.0
    %131 = vmatpush1.msra.mxu0 0.0
    %132 = vmatprep.subr.mxu0 0.0
    %133 = vmatpush1.msra.mxu0 0.0
    %134 = vmatprep.subr.mxu0 0.0
    %135 = vmatpush1.msra.mxu0 0.0
    %136 = vmatprep.subr.mxu0 0.0
    %137 = vmatpush1.msra.mxu0 0.0
    %138 = vmatprep.subr.mxu0 0.0
    %139 = vmatpush1.msra.mxu0 0.0
    %140 = vmatprep.subr.mxu0 0.0
    %141 = vmatpush1.msra.mxu0 0.0
    %142 = vmatprep.subr.mxu0 0.0
    %143 = vmatpush1.msra.mxu0 0.0
    %144 = vmatprep.subr.mxu0 0.0
    %145 = vmatpush1.msra.mxu0 0.0
    %146 = vmatprep.subr.mxu0 0.0
    %147 = vmatpush1.msra.mxu0 0.0
    %148 = vmatprep.subr.mxu0 0.0
    %149 = vmatpush1.msra.mxu0 0.0
    %150 = vmatprep.subr.mxu0 0.0
    %151 = vmatpush1.msra.mxu0 0.0
    %152 = vmatprep.subr.mxu0 0.0
    %153 = vmatpush1.msra.mxu0 0.0
    %154 = vmatprep.subr.mxu0 0.0
    %155 = vmatpush1.msra.mxu0 0.0
    %156 = vmatprep.subr.mxu0 0.0
    %157 = vmatpush1.msra.mxu0 0.0
    %158 = vmatprep.subr.mxu0 0.0
    %159 = vmatpush1.msra.mxu0 0.0
    %160 = vmatprep.subr.mxu0 0.0
    %161 = vmatpush1.msra.mxu0 0.0
    %162 = vmatprep.subr.mxu0 0.0
    %163 = vmatpush1.msra.mxu0 0.0
    %164 = vmatprep.subr.mxu0 0.0
    %165 = vmatpush1.msra.mxu0 0.0
    %166 = vmatprep.subr.mxu0 0.0
    %167 = vmatpush1.msra.mxu0 0.0
    %168 = vmatprep.subr.mxu0 0.0
    %169 = vmatpush1.msra.mxu0 0.0
    %170 = vmatprep.subr.mxu0 0.0
    %171 = vmatpush1.msra.mxu0 0.0
    %172 = vmatprep.mubr.f32.mxu0 0.0
    %173 = vmatmul.mubr.f32.gmra.mrb[0].mxu0 %v85
    %v174 = vpop.f32.mrb[0].mxu0
    %v175 = vadd.f32 %v76, %v174
    %v176 = vpop.f32.mrb[0].mxu0
    %v177 = vadd.f32 %v80, %v176
    %178 = vmatprep.mubr.f32.mxu0 0.0
    %179 = vmatmul.mubr.f32.gmra.mrb[0].mxu0 %v88
    %v180 = vpop.f32.mrb[0].mxu0
    %v181 = vadd.f32 %v76, %v180
    %v182 = vpop.f32.mrb[0].mxu0
    %v183 = vadd.f32 %v80, %v182
    %184 = vmatprep.mubr.f32.mxu0 0.0
    %185 = vmatmul.mubr.f32.gmra.mrb[0].mxu0 %v91
    %v186 = vpop.f32.mrb[0].mxu0
    %v187 = vadd.f32 %v76, %v186
    %v188 = vpop.f32.mrb[0].mxu0
    %v189 = vadd.f32 %v80, %v188
    %190 = vmatprep.mubr.f32.mxu0 0.0
    %191 = vmatmul.mubr.f32.gmra.mrb[0].mxu0 %v94
    %v192 = vpop.f32.mrb[0].mxu0
    %v193 = vadd.f32 %v76, %v192
    %v194 = vpop.f32.mrb[0].mxu0
    %v195 = vadd.f32 %v80, %v194
    %196 = vmatprep.mubr.f32.mxu0 0.0
    %197 = vmatmul.mubr.f32.gmra.mrb[0].mxu0 %v97
    %v198 = vpop.f32.mrb[0].mxu0
    %v199 = vadd.f32 %v76, %v198
    %v200 = vpop.f32.mrb[0].mxu0
    %v201 = vadd.f32 %v80, %v200
    %202 = vmatprep.mubr.f32.mxu0 0.0
    %203 = vmatmul.mubr.f32.gmra.mrb[0].mxu0 %v100
    %v204 = vpop.f32.mrb[0].mxu0
    %v205 = vadd.f32 %v76, %v204
    %v206 = vpop.f32.mrb[0].mxu0
    %v207 = vadd.f32 %v80, %v206
    %208 = vmatprep.mubr.f32.mxu0 0.0
    %209 = vmatmul.mubr.f32.gmra.mrb[0].mxu0 %v103
    %v210 = vpop.f32.mrb[0].mxu0
    %v211 = vadd.f32 %v76, %v210
    %v212 = vpop.f32.mrb[0].mxu0
    %v213 = vadd.f32 %v80, %v212
    %214 = vmatprep.mubr.f32.mxu0 0.0
    %215 = vmatmul.mubr.f32.gmra.mrb[0].mxu0 %v106
    %v216 = vpop.f32.mrb[0].mxu0
    %v217 = vadd.f32 %v76, %v216
    %v218 = vpop.f32.mrb[0].mxu0
    %v219 = vadd.f32 %v80, %v218
    %220 = vdwg.mxu0
    %221 = vst [vmem:[#allocation2] sm:$0xff] %v175
    %222 = vst [vmem:[#allocation2 + $0x8] sm:$0xff] %v177
    %223 = vst [vmem:[#allocation2 + $0x10] sm:$0xff] %v181
    %224 = vst [vmem:[#allocation2 + $0x18] sm:$0xff] %v183
    %225 = vst [vmem:[#allocation2 + $0x20] sm:$0xff] %v187
    %226 = vst [vmem:[#allocation2 + $0x28] sm:$0xff] %v189
    %227 = vst [vmem:[#allocation2 + $0x30] sm:$0xff] %v193
    %228 = vst [vmem:[#allocation2 + $0x38] sm:$0xff] %v195
    %229 = vst [vmem:[#allocation2 + $0x40] sm:$0xff] %v199
    %230 = vst [vmem:[#allocation2 + $0x48] sm:$0xff] %v201
    %231 = vst [vmem:[#allocation2 + $0x50] sm:$0xff] %v205
    %232 = vst [vmem:[#allocation2 + $0x58] sm:$0xff] %v207
    %233 = vst [vmem:[#allocation2 + $0x60] sm:$0xff] %v211
    %234 = vst [vmem:[#allocation2 + $0x68] sm:$0xff] %v213
    %235 = vst [vmem:[#allocation2 + $0x70] sm:$0xff] %v217
    %236 = vst [vmem:[#allocation2 + $0x78] sm:$0xff] %v219
    %s237 = smul.u32 0, 2
    %s238 = smul.addr %s237, 8
    %s239 = scalar_lea.vmem [#allocation2], %s238
    %v240 = vld [vmem:[%s239] sm:$0xff]
    %v241 = vld [vmem:[%s3] sm:$0xff]
    %v242 = vld [vmem:[%s3 + $0x8] sm:$0xff]
    %v243 = vld [vmem:[%s3 + $0x10] sm:$0xff]
    %v244 = vld [vmem:[%s3 + $0x18] sm:$0xff]
    %v246 = vsel %vm83, 0.0, 0
    %248 = vmatprep.subr.mxu0 0.0
    %249 = vmatpush1.msra.mxu0 %v241
    %250 = vmatprep.subr.mxu0 0.0
    %251 = vmatpush1.msra.mxu0 %v242
    %252 = vmatprep.subr.mxu0 0.0
    %253 = vmatpush1.msra.mxu0 %v243
    %254 = vmatprep.subr.mxu0 0.0
    %255 = vmatpush1.msra.mxu0 %v244
    %256 = vmatprep.subr.mxu0 0.0
    %257 = vmatpush1.msra.mxu0 0.0
    %258 = vmatprep.subr.mxu0 0.0
    %259 = vmatpush1.msra.mxu0 0.0
    %260 = vmatprep.subr.mxu0 0.0
    %261 = vmatpush1.msra.mxu0 0.0
    %262 = vmatprep.subr.mxu0 0.0
    %263 = vmatpush1.msra.mxu0 0.0
    %264 = vmatprep.subr.mxu0 0.0
    %265 = vmatpush1.msra.mxu0 0.0
    %266 = vmatprep.subr.mxu0 0.0
    %267 = vmatpush1.msra.mxu0 0.0
    %268 = vmatprep.subr.mxu0 0.0
    %269 = vmatpush1.msra.mxu0 0.0
    %270 = vmatprep.subr.mxu0 0.0
    %271 = vmatpush1.msra.mxu0 0.0
    %272 = vmatprep.subr.mxu0 0.0
    %273 = vmatpush1.msra.mxu0 0.0
    %274 = vmatprep.subr.mxu0 0.0
    %275 = vmatpush1.msra.mxu0 0.0
    %276 = vmatprep.subr.mxu0 0.0
    %277 = vmatpush1.msra.mxu0 0.0
    %278 = vmatprep.subr.mxu0 0.0
    %279 = vmatpush1.msra.mxu0 0.0
    %280 = vmatprep.subr.mxu0 0.0
    %281 = vmatpush1.msra.mxu0 0.0
    %282 = vmatprep.subr.mxu0 0.0
    %283 = vmatpush1.msra.mxu0 0.0
    %284 = vmatprep.subr.mxu0 0.0
    %285 = vmatpush1.msra.mxu0 0.0
    %286 = vmatprep.subr.mxu0 0.0
    %287 = vmatpush1.msra.mxu0 0.0
    %288 = vmatprep.subr.mxu0 0.0
    %289 = vmatpush1.msra.mxu0 0.0
    %290 = vmatprep.subr.mxu0 0.0
    %291 = vmatpush1.msra.mxu0 0.0
    %292 = vmatprep.subr.mxu0 0.0
    %293 = vmatpush1.msra.mxu0 0.0
    %294 = vmatprep.subr.mxu0 0.0
    %295 = vmatpush1.msra.mxu0 0.0
    %296 = vmatprep.subr.mxu0 0.0
    %297 = vmatpush1.msra.mxu0 0.0
    %298 = vmatprep.subr.mxu0 0.0
    %299 = vmatpush1.msra.mxu0 0.0
    %300 = vmatprep.subr.mxu0 0.0
    %301 = vmatpush1.msra.mxu0 0.0
    %302 = vmatprep.subr.mxu0 0.0
    %303 = vmatpush1.msra.mxu0 0.0
    %304 = vmatprep.subr.mxu0 0.0
    %305 = vmatpush1.msra.mxu0 0.0
    %306 = vmatprep.subr.mxu0 0.0
    %307 = vmatpush1.msra.mxu0 0.0
    %308 = vmatprep.subr.mxu0 0.0
    %309 = vmatpush1.msra.mxu0 0.0
    %310 = vmatprep.subr.mxu0 0.0
    %311 = vmatpush1.msra.mxu0 0.0
    %312 = vmatprep.mubr.f32.mxu0 0.0
    %313 = vmatmul.mubr.f32.gmra.mrb[0].mxu0 %v246
    %v314 = vpop.f32.mrb[0].mxu0
    %v315 = vadd.f32 0.0, %v314
    %v316 = vpop.f32.mrb[0].mxu0
    %317 = vdwg.mxu0
    %v318 = vadd.f32 %v240, %v315
    %v319 = vxor.u32 %v318, 2147483648
    %v320 = vmul.f32 %v319, 1.442695
    %v321 = vpow.pop %v320
    %v322 = vadd.f32 %v321, 1.0
    %v323 = vrcp.pop %v322
    %v324 = vmul.f32 1.0, %v323
    %v325 = vtanh.pop %v318
    %v326 = vmul.f32 %v324, 0.0
    %328 = vrot.lane.b32.xlu0 %v325, 32
    %v329 = vpop.permute.xlu0 %328
    %v331 = vmul.f32 %v324, %v329
    %333 = vrot.lane.b32.xlu0 %v331, 32
    %v334 = vpop.permute.xlu0 %333
    %v336 = vadd.f32 %v326, %v334
    %v337 = vtanh.pop %v336
    %339 = vrot.lane.b32.xlu0 %v337, 32
    %v340 = vpop.permute.xlu0 %339
    %v342 = vmul.f32 %v324, %v340
    %344 = vrot.lane.b32.xlu0 %v342, 64
    %v345 = vpop.permute.xlu0 %344
    %347 = vst.msk [vmem:[#allocation3] sm:$0xff] %vm83, %v345
    %s348 = smul.u32 7, 2
    %s349 = smul.addr %s348, 8
    %s350 = scalar_lea.vmem [#allocation2], %s349
    %v351 = vld [vmem:[%s350 + $0x8] sm:$0xff]
    %v352 = vld [vmem:[#allocation4] sm:$0xff]
    %v353 = vld [vmem:[#allocation4 + $0x8] sm:$0xff]
    %v354 = vld [vmem:[#allocation4 + $0x10] sm:$0xff]
    %v355 = vld [vmem:[#allocation4 + $0x18] sm:$0xff]
    %356 = vmatprep.subr.mxu0 0.0
    %357 = vmatpush1.msra.mxu0 %v352
    %358 = vmatprep.subr.mxu0 0.0
    %359 = vmatpush1.msra.mxu0 %v353
    %360 = vmatprep.subr.mxu0 0.0
    %361 = vmatpush1.msra.mxu0 %v354
    %362 = vmatprep.subr.mxu0 0.0
    %363 = vmatpush1.msra.mxu0 %v355
    %364 = vmatprep.subr.mxu0 0.0
    %365 = vmatpush1.msra.mxu0 0.0
    %366 = vmatprep.subr.mxu0 0.0
    %367 = vmatpush1.msra.mxu0 0.0
    %368 = vmatprep.subr.mxu0 0.0
    %369 = vmatpush1.msra.mxu0 0.0
    %370 = vmatprep.subr.mxu0 0.0
    %371 = vmatpush1.msra.mxu0 0.0
    %372 = vmatprep.subr.mxu0 0.0
    %373 = vmatpush1.msra.mxu0 0.0
    %374 = vmatprep.subr.mxu0 0.0
    %375 = vmatpush1.msra.mxu0 0.0
    %376 = vmatprep.subr.mxu0 0.0
    %377 = vmatpush1.msra.mxu0 0.0
    %378 = vmatprep.subr.mxu0 0.0
    %379 = vmatpush1.msra.mxu0 0.0
    %380 = vmatprep.subr.mxu0 0.0
    %381 = vmatpush1.msra.mxu0 0.0
    %382 = vmatprep.subr.mxu0 0.0
    %383 = vmatpush1.msra.mxu0 0.0
    %384 = vmatprep.subr.mxu0 0.0
    %385 = vmatpush1.msra.mxu0 0.0
    %386 = vmatprep.subr.mxu0 0.0
    %387 = vmatpush1.msra.mxu0 0.0
    %388 = vmatprep.subr.mxu0 0.0
    %389 = vmatpush1.msra.mxu0 0.0
    %390 = vmatprep.subr.mxu0 0.0
    %391 = vmatpush1.msra.mxu0 0.0
    %392 = vmatprep.subr.mxu0 0.0
    %393 = vmatpush1.msra.mxu0 0.0
    %394 = vmatprep.subr.mxu0 0.0
    %395 = vmatpush1.msra.mxu0 0.0
    %396 = vmatprep.subr.mxu0 0.0
    %397 = vmatpush1.msra.mxu0 0.0
    %398 = vmatprep.subr.mxu0 0.0
    %399 = vmatpush1.msra.mxu0 0.0
    %400 = vmatprep.subr.mxu0 0.0
    %401 = vmatpush1.msra.mxu0 0.0
    %402 = vmatprep.subr.mxu0 0.0
    %403 = vmatpush1.msra.mxu0 0.0
    %404 = vmatprep.subr.mxu0 0.0
    %405 = vmatpush1.msra.mxu0 0.0
    %406 = vmatprep.subr.mxu0 0.0
    %407 = vmatpush1.msra.mxu0 0.0
    %408 = vmatprep.subr.mxu0 0.0
    %409 = vmatpush1.msra.mxu0 0.0
    %410 = vmatprep.subr.mxu0 0.0
    %411 = vmatpush1.msra.mxu0 0.0
    %412 = vmatprep.subr.mxu0 0.0
    %413 = vmatpush1.msra.mxu0 0.0
    %414 = vmatprep.subr.mxu0 0.0
    %415 = vmatpush1.msra.mxu0 0.0
    %416 = vmatprep.subr.mxu0 0.0
    %417 = vmatpush1.msra.mxu0 0.0
    %418 = vmatprep.subr.mxu0 0.0
    %419 = vmatpush1.msra.mxu0 0.0
    %420 = vmatprep.mubr.f32.mxu0 0.0
    %421 = vmatmul.mubr.f32.gmra.mrb[0].mxu0 %v246
    %v422 = vpop.f32.mrb[0].mxu0
    %v423 = vadd.f32 0.0, %v422
    %v424 = vpop.f32.mrb[0].mxu0
    %425 = vdwg.mxu0
    %v426 = vadd.f32 %v351, %v423
    %v427 = vxor.u32 %v426, 2147483648
    %v428 = vmul.f32 %v427, 1.442695
    %v429 = vpow.pop %v428
    %v430 = vadd.f32 %v429, 1.0
    %v431 = vrcp.pop %v430
    %v432 = vmul.f32 1.0, %v431
    %v433 = vtanh.pop %v426
    %v434 = vmul.f32 %v432, 0.0
    %436 = vrot.lane.b32.xlu0 %v433, 32
    %v437 = vpop.permute.xlu0 %436
    %v439 = vmul.f32 %v432, %v437
    %441 = vrot.lane.b32.xlu0 %v439, 32
    %v442 = vpop.permute.xlu0 %441
    %v444 = vadd.f32 %v434, %v442
    %v445 = vtanh.pop %v444
    %447 = vrot.lane.b32.xlu0 %v445, 32
    %v448 = vpop.permute.xlu0 %447
    %v450 = vmul.f32 %v432, %v448
    %452 = vrot.lane.b32.xlu0 %v450, 96
    %v453 = vpop.permute.xlu0 %452
    %s455 = scalar_lea.vmem [#allocation3], 56
    %vm456 = vcmask 523520
    %457 = vst.msk [vmem:[%s455] sm:$0xff] %vm456, %v453
    %s458 = smul.u32 1, 2
    %s459 = smul.addr %s458, 8
    %s460 = scalar_lea.vmem [#allocation2], %s459
    %v461 = vld [vmem:[%s460] sm:$0xff]
    %v462 = vld [vmem:[%s3] sm:$0xff]
    %v463 = vld [vmem:[%s3 + $0x8] sm:$0xff]
    %v464 = vld [vmem:[%s3 + $0x10] sm:$0xff]
    %v465 = vld [vmem:[%s3 + $0x18] sm:$0xff]
    %v466 = vsel %vm83, %v345, 0
    %468 = vmatprep.subr.mxu0 0.0
    %469 = vmatpush1.msra.mxu0 %v462
    %470 = vmatprep.subr.mxu0 0.0
    %471 = vmatpush1.msra.mxu0 %v463
    %472 = vmatprep.subr.mxu0 0.0
    %473 = vmatpush1.msra.mxu0 %v464
    %474 = vmatprep.subr.mxu0 0.0
    %475 = vmatpush1.msra.mxu0 %v465
    %476 = vmatprep.subr.mxu0 0.0
    %477 = vmatpush1.msra.mxu0 0.0
    %478 = vmatprep.subr.mxu0 0.0
    %479 = vmatpush1.msra.mxu0 0.0
    %480 = vmatprep.subr.mxu0 0.0
    %481 = vmatpush1.msra.mxu0 0.0
    %482 = vmatprep.subr.mxu0 0.0
    %483 = vmatpush1.msra.mxu0 0.0
    %484 = vmatprep.subr.mxu0 0.0
    %485 = vmatpush1.msra.mxu0 0.0
    %486 = vmatprep.subr.mxu0 0.0
    %487 = vmatpush1.msra.mxu0 0.0
    %488 = vmatprep.subr.mxu0 0.0
    %489 = vmatpush1.msra.mxu0 0.0
    %490 = vmatprep.subr.mxu0 0.0
    %491 = vmatpush1.msra.mxu0 0.0
    %492 = vmatprep.subr.mxu0 0.0
    %493 = vmatpush1.msra.mxu0 0.0
    %494 = vmatprep.subr.mxu0 0.0
    %495 = vmatpush1.msra.mxu0 0.0
    %496 = vmatprep.subr.mxu0 0.0
    %497 = vmatpush1.msra.mxu0 0.0
    %498 = vmatprep.subr.mxu0 0.0
    %499 = vmatpush1.msra.mxu0 0.0
    %500 = vmatprep.subr.mxu0 0.0
    %501 = vmatpush1.msra.mxu0 0.0
    %502 = vmatprep.subr.mxu0 0.0
    %503 = vmatpush1.msra.mxu0 0.0
    %504 = vmatprep.subr.mxu0 0.0
    %505 = vmatpush1.msra.mxu0 0.0
    %506 = vmatprep.subr.mxu0 0.0
    %507 = vmatpush1.msra.mxu0 0.0
    %508 = vmatprep.subr.mxu0 0.0
    %509 = vmatpush1.msra.mxu0 0.0
    %510 = vmatprep.subr.mxu0 0.0
    %511 = vmatpush1.msra.mxu0 0.0
    %512 = vmatprep.subr.mxu0 0.0
    %513 = vmatpush1.msra.mxu0 0.0
    %514 = vmatprep.subr.mxu0 0.0
    %515 = vmatpush1.msra.mxu0 0.0
    %516 = vmatprep.subr.mxu0 0.0
    %517 = vmatpush1.msra.mxu0 0.0
    %518 = vmatprep.subr.mxu0 0.0
    %519 = vmatpush1.msra.mxu0 0.0
    %520 = vmatprep.subr.mxu0 0.0
    %521 = vmatpush1.msra.mxu0 0.0
    %522 = vmatprep.subr.mxu0 0.0
    %523 = vmatpush1.msra.mxu0 0.0
    %524 = vmatprep.subr.mxu0 0.0
    %525 = vmatpush1.msra.mxu0 0.0
    %526 = vmatprep.subr.mxu0 0.0
    %527 = vmatpush1.msra.mxu0 0.0
    %528 = vmatprep.subr.mxu0 0.0
    %529 = vmatpush1.msra.mxu0 0.0
    %530 = vmatprep.subr.mxu0 0.0
    %531 = vmatpush1.msra.mxu0 0.0
    %532 = vmatprep.mubr.f32.mxu0 0.0
    %533 = vmatmul.mubr.f32.gmra.mrb[0].mxu0 %v466
    %v534 = vpop.f32.mrb[0].mxu0
    %v535 = vadd.f32 0.0, %v534
    %v536 = vpop.f32.mrb[0].mxu0
    %537 = vdwg.mxu0
    %v538 = vadd.f32 %v461, %v535
    %v539 = vxor.u32 %v538, 2147483648
    %v540 = vmul.f32 %v539, 1.442695
    %v541 = vpow.pop %v540
    %v542 = vadd.f32 %v541, 1.0
    %v543 = vrcp.pop %v542
    %v544 = vmul.f32 1.0, %v543
    %v545 = vtanh.pop %v538
    %v546 = vmul.f32 %v544, %v336
    %548 = vrot.lane.b32.xlu0 %v545, 32
    %v549 = vpop.permute.xlu0 %548
    %v551 = vmul.f32 %v544, %v549
    %553 = vrot.lane.b32.xlu0 %v551, 32
    %v554 = vpop.permute.xlu0 %553
    %v556 = vadd.f32 %v546, %v554
    %v557 = vtanh.pop %v556
    %559 = vrot.lane.b32.xlu0 %v557, 32
    %v560 = vpop.permute.xlu0 %559
    %v562 = vmul.f32 %v544, %v560
    %564 = vrot.lane.b32.xlu0 %v562, 64
    %v565 = vpop.permute.xlu0 %564
    %s567 = scalar_lea.vmem [#allocation3], 8
    %568 = vst.msk [vmem:[%s567] sm:$0xff] %vm83, %v565
    %s569 = smul.u32 6, 2
    %s570 = smul.addr %s569, 8
    %s571 = scalar_lea.vmem [#allocation2], %s570
    %v572 = vld [vmem:[%s571 + $0x8] sm:$0xff]
    %v573 = vld [vmem:[#allocation4] sm:$0xff]
    %v574 = vld [vmem:[#allocation4 + $0x8] sm:$0xff]
    %v575 = vld [vmem:[#allocation4 + $0x10] sm:$0xff]
    %v576 = vld [vmem:[#allocation4 + $0x18] sm:$0xff]
    %577 = vrot.lane.b32.xlu0 %v450, 64
    %v578 = vpop.permute.xlu0 %577
    %v579 = vsel %vm83, %v578, 0
    %581 = vmatprep.subr.mxu0 0.0
    %582 = vmatpush1.msra.mxu0 %v573
    %583 = vmatprep.subr.mxu0 0.0
    %584 = vmatpush1.msra.mxu0 %v574
    %585 = vmatprep.subr.mxu0 0.0
    %586 = vmatpush1.msra.mxu0 %v575
    %587 = vmatprep.subr.mxu0 0.0
    %588 = vmatpush1.msra.mxu0 %v576
    %589 = vmatprep.subr.mxu0 0.0
    %590 = vmatpush1.msra.mxu0 0.0
    %591 = vmatprep.subr.mxu0 0.0
    %592 = vmatpush1.msra.mxu0 0.0
    %593 = vmatprep.subr.mxu0 0.0
    %594 = vmatpush1.msra.mxu0 0.0
    %595 = vmatprep.subr.mxu0 0.0
    %596 = vmatpush1.msra.mxu0 0.0
    %597 = vmatprep.subr.mxu0 0.0
    %598 = vmatpush1.msra.mxu0 0.0
    %599 = vmatprep.subr.mxu0 0.0
    %600 = vmatpush1.msra.mxu0 0.0
    %601 = vmatprep.subr.mxu0 0.0
    %602 = vmatpush1.msra.mxu0 0.0
    %603 = vmatprep.subr.mxu0 0.0
    %604 = vmatpush1.msra.mxu0 0.0
    %605 = vmatprep.subr.mxu0 0.0
    %606 = vmatpush1.msra.mxu0 0.0
    %607 = vmatprep.subr.mxu0 0.0
    %608 = vmatpush1.msra.mxu0 0.0
    %609 = vmatprep.subr.mxu0 0.0
    %610 = vmatpush1.msra.mxu0 0.0
    %611 = vmatprep.subr.mxu0 0.0
    %612 = vmatpush1.msra.mxu0 0.0
    %613 = vmatprep.subr.mxu0 0.0
    %614 = vmatpush1.msra.mxu0 0.0
    %615 = vmatprep.subr.mxu0 0.0
    %616 = vmatpush1.msra.mxu0 0.0
    %617 = vmatprep.subr.mxu0 0.0
    %618 = vmatpush1.msra.mxu0 0.0
    %619 = vmatprep.subr.mxu0 0.0
    %620 = vmatpush1.msra.mxu0 0.0
    %621 = vmatprep.subr.mxu0 0.0
    %622 = vmatpush1.msra.mxu0 0.0
    %623 = vmatprep.subr.mxu0 0.0
    %624 = vmatpush1.msra.mxu0 0.0
    %625 = vmatprep.subr.mxu0 0.0
    %626 = vmatpush1.msra.mxu0 0.0
    %627 = vmatprep.subr.mxu0 0.0
    %628 = vmatpush1.msra.mxu0 0.0
    %629 = vmatprep.subr.mxu0 0.0
    %630 = vmatpush1.msra.mxu0 0.0
    %631 = vmatprep.subr.mxu0 0.0
    %632 = vmatpush1.msra.mxu0 0.0
    %633 = vmatprep.subr.mxu0 0.0
    %634 = vmatpush1.msra.mxu0 0.0
    %635 = vmatprep.subr.mxu0 0.0
    %636 = vmatpush1.msra.mxu0 0.0
    %637 = vmatprep.subr.mxu0 0.0
    %638 = vmatpush1.msra.mxu0 0.0
    %639 = vmatprep.subr.mxu0 0.0
    %640 = vmatpush1.msra.mxu0 0.0
    %641 = vmatprep.subr.mxu0 0.0
    %642 = vmatpush1.msra.mxu0 0.0
    %643 = vmatprep.subr.mxu0 0.0
    %644 = vmatpush1.msra.mxu0 0.0
    %645 = vmatprep.mubr.f32.mxu0 0.0
    %646 = vmatmul.mubr.f32.gmra.mrb[0].mxu0 %v579
    %v647 = vpop.f32.mrb[0].mxu0
    %v648 = vadd.f32 0.0, %v647
    %v649 = vpop.f32.mrb[0].mxu0
    %650 = vdwg.mxu0
    %v651 = vadd.f32 %v572, %v648
    %v652 = vxor.u32 %v651, 2147483648
    %v653 = vmul.f32 %v652, 1.442695
    %v654 = vpow.pop %v653
    %v655 = vadd.f32 %v654, 1.0
    %v656 = vrcp.pop %v655
    %v657 = vmul.f32 1.0, %v656
    %v658 = vtanh.pop %v651
    %v659 = vmul.f32 %v657, %v444
    %661 = vrot.lane.b32.xlu0 %v658, 32
    %v662 = vpop.permute.xlu0 %661
    %v664 = vmul.f32 %v657, %v662
    %666 = vrot.lane.b32.xlu0 %v664, 32
    %v667 = vpop.permute.xlu0 %666
    %v669 = vadd.f32 %v659, %v667
    %v670 = vtanh.pop %v669
    %672 = vrot.lane.b32.xlu0 %v670, 32
    %v673 = vpop.permute.xlu0 %672
    %v675 = vmul.f32 %v657, %v673
    %677 = vrot.lane.b32.xlu0 %v675, 96
    %v678 = vpop.permute.xlu0 %677
    %s680 = scalar_lea.vmem [#allocation3], 48
    %681 = vst.msk [vmem:[%s680] sm:$0xff] %vm456, %v678
    %s682 = smul.u32 2, 2
    %s683 = smul.addr %s682, 8
    %s684 = scalar_lea.vmem [#allocation2], %s683
    %v685 = vld [vmem:[%s684] sm:$0xff]
    %v686 = vld [vmem:[%s3] sm:$0xff]
    %v687 = vld [vmem:[%s3 + $0x8] sm:$0xff]
    %v688 = vld [vmem:[%s3 + $0x10] sm:$0xff]
    %v689 = vld [vmem:[%s3 + $0x18] sm:$0xff]
    %v690 = vsel %vm83, %v565, 0
    %692 = vmatprep.subr.mxu0 0.0
    %693 = vmatpush1.msra.mxu0 %v686
    %694 = vmatprep.subr.mxu0 0.0
    %695 = vmatpush1.msra.mxu0 %v687
    %696 = vmatprep.subr.mxu0 0.0
    %697 = vmatpush1.msra.mxu0 %v688
    %698 = vmatprep.subr.mxu0 0.0
    %699 = vmatpush1.msra.mxu0 %v689
    %700 = vmatprep.subr.mxu0 0.0
    %701 = vmatpush1.msra.mxu0 0.0
    %702 = vmatprep.subr.mxu0 0.0
    %703 = vmatpush1.msra.mxu0 0.0
    %704 = vmatprep.subr.mxu0 0.0
    %705 = vmatpush1.msra.mxu0 0.0
    %706 = vmatprep.subr.mxu0 0.0
    %707 = vmatpush1.msra.mxu0 0.0
    %708 = vmatprep.subr.mxu0 0.0
    %709 = vmatpush1.msra.mxu0 0.0
    %710 = vmatprep.subr.mxu0 0.0
    %711 = vmatpush1.msra.mxu0 0.0
    %712 = vmatprep.subr.mxu0 0.0
    %713 = vmatpush1.msra.mxu0 0.0
    %714 = vmatprep.subr.mxu0 0.0
    %715 = vmatpush1.msra.mxu0 0.0
    %716 = vmatprep.subr.mxu0 0.0
    %717 = vmatpush1.msra.mxu0 0.0
    %718 = vmatprep.subr.mxu0 0.0
    %719 = vmatpush1.msra.mxu0 0.0
    %720 = vmatprep.subr.mxu0 0.0
    %721 = vmatpush1.msra.mxu0 0.0
    %722 = vmatprep.subr.mxu0 0.0
    %723 = vmatpush1.msra.mxu0 0.0
    %724 = vmatprep.subr.mxu0 0.0
    %725 = vmatpush1.msra.mxu0 0.0
    %726 = vmatprep.subr.mxu0 0.0
    %727 = vmatpush1.msra.mxu0 0.0
    %728 = vmatprep.subr.mxu0 0.0
    %729 = vmatpush1.msra.mxu0 0.0
    %730 = vmatprep.subr.mxu0 0.0
    %731 = vmatpush1.msra.mxu0 0.0
    %732 = vmatprep.subr.mxu0 0.0
    %733 = vmatpush1.msra.mxu0 0.0
    %734 = vmatprep.subr.mxu0 0.0
    %735 = vmatpush1.msra.mxu0 0.0
    %736 = vmatprep.subr.mxu0 0.0
    %737 = vmatpush1.msra.mxu0 0.0
    %738 = vmatprep.subr.mxu0 0.0
    %739 = vmatpush1.msra.mxu0 0.0
    %740 = vmatprep.subr.mxu0 0.0
    %741 = vmatpush1.msra.mxu0 0.0
    %742 = vmatprep.subr.mxu0 0.0
    %743 = vmatpush1.msra.mxu0 0.0
    %744 = vmatprep.subr.mxu0 0.0
    %745 = vmatpush1.msra.mxu0 0.0
    %746 = vmatprep.subr.mxu0 0.0
    %747 = vmatpush1.msra.mxu0 0.0
    %748 = vmatprep.subr.mxu0 0.0
    %749 = vmatpush1.msra.mxu0 0.0
    %750 = vmatprep.subr.mxu0 0.0
    %751 = vmatpush1.msra.mxu0 0.0
    %752 = vmatprep.subr.mxu0 0.0
    %753 = vmatpush1.msra.mxu0 0.0
    %754 = vmatprep.subr.mxu0 0.0
    %755 = vmatpush1.msra.mxu0 0.0
    %756 = vmatprep.mubr.f32.mxu0 0.0
    %757 = vmatmul.mubr.f32.gmra.mrb[0].mxu0 %v690
    %v758 = vpop.f32.mrb[0].mxu0
    %v759 = vadd.f32 0.0, %v758
    %v760 = vpop.f32.mrb[0].mxu0
    %761 = vdwg.mxu0
    %v762 = vadd.f32 %v685, %v759
    %v763 = vxor.u32 %v762, 2147483648
    %v764 = vmul.f32 %v763, 1.442695
    %v765 = vpow.pop %v764
    %v766 = vadd.f32 %v765, 1.0
    %v767 = vrcp.pop %v766
    %v768 = vmul.f32 1.0, %v767
    %v769 = vtanh.pop %v762
    %v770 = vmul.f32 %v768, %v556
    %772 = vrot.lane.b32.xlu0 %v769, 32
    %v773 = vpop.permute.xlu0 %772
    %v775 = vmul.f32 %v768, %v773
    %777 = vrot.lane.b32.xlu0 %v775, 32
    %v778 = vpop.permute.xlu0 %777
    %v780 = vadd.f32 %v770, %v778
    %v781 = vtanh.pop %v780
    %783 = vrot.lane.b32.xlu0 %v781, 32
    %v784 = vpop.permute.xlu0 %783
    %v786 = vmul.f32 %v768, %v784
    %788 = vrot.lane.b32.xlu0 %v786, 64
    %v789 = vpop.permute.xlu0 %788
    %s791 = scalar_lea.vmem [#allocation3], 16
    %792 = vst.msk [vmem:[%s791] sm:$0xff] %vm83, %v789
    %s793 = smul.u32 5, 2
    %s794 = smul.addr %s793, 8
    %s795 = scalar_lea.vmem [#allocation2], %s794
    %v796 = vld [vmem:[%s795 + $0x8] sm:$0xff]
    %v797 = vld [vmem:[#allocation4] sm:$0xff]
    %v798 = vld [vmem:[#allocation4 + $0x8] sm:$0xff]
    %v799 = vld [vmem:[#allocation4 + $0x10] sm:$0xff]
    %v800 = vld [vmem:[#allocation4 + $0x18] sm:$0xff]
    %801 = vrot.lane.b32.xlu0 %v675, 64
    %v802 = vpop.permute.xlu0 %801
    %v803 = vsel %vm83, %v802, 0
    %805 = vmatprep.subr.mxu0 0.0
    %806 = vmatpush1.msra.mxu0 %v797
    %807 = vmatprep.subr.mxu0 0.0
    %808 = vmatpush1.msra.mxu0 %v798
    %809 = vmatprep.subr.mxu0 0.0
    %810 = vmatpush1.msra.mxu0 %v799
    %811 = vmatprep.subr.mxu0 0.0
    %812 = vmatpush1.msra.mxu0 %v800
    %813 = vmatprep.subr.mxu0 0.0
    %814 = vmatpush1.msra.mxu0 0.0
    %815 = vmatprep.subr.mxu0 0.0
    %816 = vmatpush1.msra.mxu0 0.0
    %817 = vmatprep.subr.mxu0 0.0
    %818 = vmatpush1.msra.mxu0 0.0
    %819 = vmatprep.subr.mxu0 0.0
    %820 = vmatpush1.msra.mxu0 0.0
    %821 = vmatprep.subr.mxu0 0.0
    %822 = vmatpush1.msra.mxu0 0.0
    %823 = vmatprep.subr.mxu0 0.0
    %824 = vmatpush1.msra.mxu0 0.0
    %825 = vmatprep.subr.mxu0 0.0
    %826 = vmatpush1.msra.mxu0 0.0
    %827 = vmatprep.subr.mxu0 0.0
    %828 = vmatpush1.msra.mxu0 0.0
    %829 = vmatprep.subr.mxu0 0.0
    %830 = vmatpush1.msra.mxu0 0.0
    %831 = vmatprep.subr.mxu0 0.0
    %832 = vmatpush1.msra.mxu0 0.0
    %833 = vmatprep.subr.mxu0 0.0
    %834 = vmatpush1.msra.mxu0 0.0
    %835 = vmatprep.subr.mxu0 0.0
    %836 = vmatpush1.msra.mxu0 0.0
    %837 = vmatprep.subr.mxu0 0.0
    %838 = vmatpush1.msra.mxu0 0.0
    %839 = vmatprep.subr.mxu0 0.0
    %840 = vmatpush1.msra.mxu0 0.0
    %841 = vmatprep.subr.mxu0 0.0
    %842 = vmatpush1.msra.mxu0 0.0
    %843 = vmatprep.subr.mxu0 0.0
    %844 = vmatpush1.msra.mxu0 0.0
    %845 = vmatprep.subr.mxu0 0.0
    %846 = vmatpush1.msra.mxu0 0.0
    %847 = vmatprep.subr.mxu0 0.0
    %848 = vmatpush1.msra.mxu0 0.0
    %849 = vmatprep.subr.mxu0 0.0
    %850 = vmatpush1.msra.mxu0 0.0
    %851 = vmatprep.subr.mxu0 0.0
    %852 = vmatpush1.msra.mxu0 0.0
    %853 = vmatprep.subr.mxu0 0.0
    %854 = vmatpush1.msra.mxu0 0.0
    %855 = vmatprep.subr.mxu0 0.0
    %856 = vmatpush1.msra.mxu0 0.0
    %857 = vmatprep.subr.mxu0 0.0
    %858 = vmatpush1.msra.mxu0 0.0
    %859 = vmatprep.subr.mxu0 0.0
    %860 = vmatpush1.msra.mxu0 0.0
    %861 = vmatprep.subr.mxu0 0.0
    %862 = vmatpush1.msra.mxu0 0.0
    %863 = vmatprep.subr.mxu0 0.0
    %864 = vmatpush1.msra.mxu0 0.0
    %865 = vmatprep.subr.mxu0 0.0
    %866 = vmatpush1.msra.mxu0 0.0
    %867 = vmatprep.subr.mxu0 0.0
    %868 = vmatpush1.msra.mxu0 0.0
    %869 = vmatprep.mubr.f32.mxu0 0.0
    %870 = vmatmul.mubr.f32.gmra.mrb[0].mxu0 %v803
    %v871 = vpop.f32.mrb[0].mxu0
    %v872 = vadd.f32 0.0, %v871
    %v873 = vpop.f32.mrb[0].mxu0
    %874 = vdwg.mxu0
    %v875 = vadd.f32 %v796, %v872
    %v876 = vxor.u32 %v875, 2147483648
    %v877 = vmul.f32 %v876, 1.442695
    %v878 = vpow.pop %v877
    %v879 = vadd.f32 %v878, 1.0
    %v880 = vrcp.pop %v879
    %v881 = vmul.f32 1.0, %v880
    %v882 = vtanh.pop %v875
    %v883 = vmul.f32 %v881, %v669
    %885 = vrot.lane.b32.xlu0 %v882, 32
    %v886 = vpop.permute.xlu0 %885
    %v888 = vmul.f32 %v881, %v886
    %890 = vrot.lane.b32.xlu0 %v888, 32
    %v891 = vpop.permute.xlu0 %890
    %v893 = vadd.f32 %v883, %v891
    %v894 = vtanh.pop %v893
    %896 = vrot.lane.b32.xlu0 %v894, 32
    %v897 = vpop.permute.xlu0 %896
    %v899 = vmul.f32 %v881, %v897
    %901 = vrot.lane.b32.xlu0 %v899, 96
    %v902 = vpop.permute.xlu0 %901
    %s904 = scalar_lea.vmem [#allocation3], 40
    %905 = vst.msk [vmem:[%s904] sm:$0xff] %vm456, %v902
    %s906 = smul.u32 3, 2
    %s907 = smul.addr %s906, 8
    %s908 = scalar_lea.vmem [#allocation2], %s907
    %v909 = vld [vmem:[%s908] sm:$0xff]
    %v910 = vld [vmem:[%s3] sm:$0xff]
    %v911 = vld [vmem:[%s3 + $0x8] sm:$0xff]
    %v912 = vld [vmem:[%s3 + $0x10] sm:$0xff]
    %v913 = vld [vmem:[%s3 + $0x18] sm:$0xff]
    %v914 = vsel %vm83, %v789, 0
    %916 = vmatprep.subr.mxu0 0.0
    %917 = vmatpush1.msra.mxu0 %v910
    %918 = vmatprep.subr.mxu0 0.0
    %919 = vmatpush1.msra.mxu0 %v911
    %920 = vmatprep.subr.mxu0 0.0
    %921 = vmatpush1.msra.mxu0 %v912
    %922 = vmatprep.subr.mxu0 0.0
    %923 = vmatpush1.msra.mxu0 %v913
    %924 = vmatprep.subr.mxu0 0.0
    %925 = vmatpush1.msra.mxu0 0.0
    %926 = vmatprep.subr.mxu0 0.0
    %927 = vmatpush1.msra.mxu0 0.0
    %928 = vmatprep.subr.mxu0 0.0
    %929 = vmatpush1.msra.mxu0 0.0
    %930 = vmatprep.subr.mxu0 0.0
    %931 = vmatpush1.msra.mxu0 0.0
    %932 = vmatprep.subr.mxu0 0.0
    %933 = vmatpush1.msra.mxu0 0.0
    %934 = vmatprep.subr.mxu0 0.0
    %935 = vmatpush1.msra.mxu0 0.0
    %936 = vmatprep.subr.mxu0 0.0
    %937 = vmatpush1.msra.mxu0 0.0
    %938 = vmatprep.subr.mxu0 0.0
    %939 = vmatpush1.msra.mxu0 0.0
    %940 = vmatprep.subr.mxu0 0.0
    %941 = vmatpush1.msra.mxu0 0.0
    %942 = vmatprep.subr.mxu0 0.0
    %943 = vmatpush1.msra.mxu0 0.0
    %944 = vmatprep.subr.mxu0 0.0
    %945 = vmatpush1.msra.mxu0 0.0
    %946 = vmatprep.subr.mxu0 0.0
    %947 = vmatpush1.msra.mxu0 0.0
    %948 = vmatprep.subr.mxu0 0.0
    %949 = vmatpush1.msra.mxu0 0.0
    %950 = vmatprep.subr.mxu0 0.0
    %951 = vmatpush1.msra.mxu0 0.0
    %952 = vmatprep.subr.mxu0 0.0
    %953 = vmatpush1.msra.mxu0 0.0
    %954 = vmatprep.subr.mxu0 0.0
    %955 = vmatpush1.msra.mxu0 0.0
    %956 = vmatprep.subr.mxu0 0.0
    %957 = vmatpush1.msra.mxu0 0.0
    %958 = vmatprep.subr.mxu0 0.0
    %959 = vmatpush1.msra.mxu0 0.0
    %960 = vmatprep.subr.mxu0 0.0
    %961 = vmatpush1.msra.mxu0 0.0
    %962 = vmatprep.subr.mxu0 0.0
    %963 = vmatpush1.msra.mxu0 0.0
    %964 = vmatprep.subr.mxu0 0.0
    %965 = vmatpush1.msra.mxu0 0.0
    %966 = vmatprep.subr.mxu0 0.0
    %967 = vmatpush1.msra.mxu0 0.0
    %968 = vmatprep.subr.mxu0 0.0
    %969 = vmatpush1.msra.mxu0 0.0
    %970 = vmatprep.subr.mxu0 0.0
    %971 = vmatpush1.msra.mxu0 0.0
    %972 = vmatprep.subr.mxu0 0.0
    %973 = vmatpush1.msra.mxu0 0.0
    %974 = vmatprep.subr.mxu0 0.0
    %975 = vmatpush1.msra.mxu0 0.0
    %976 = vmatprep.subr.mxu0 0.0
    %977 = vmatpush1.msra.mxu0 0.0
    %978 = vmatprep.subr.mxu0 0.0
    %979 = vmatpush1.msra.mxu0 0.0
    %980 = vmatprep.mubr.f32.mxu0 0.0
    %981 = vmatmul.mubr.f32.gmra.mrb[0].mxu0 %v914
    %v982 = vpop.f32.mrb[0].mxu0
    %v983 = vadd.f32 0.0, %v982
    %v984 = vpop.f32.mrb[0].mxu0
    %985 = vdwg.mxu0
    %v986 = vadd.f32 %v909, %v983
    %v987 = vxor.u32 %v986, 2147483648
    %v988 = vmul.f32 %v987, 1.442695
    %v989 = vpow.pop %v988
    %v990 = vadd.f32 %v989, 1.0
    %v991 = vrcp.pop %v990
    %v992 = vmul.f32 1.0, %v991
    %v993 = vtanh.pop %v986
    %v994 = vmul.f32 %v992, %v780
    %996 = vrot.lane.b32.xlu0 %v993, 32
    %v997 = vpop.permute.xlu0 %996
    %v999 = vmul.f32 %v992, %v997
    %1001 = vrot.lane.b32.xlu0 %v999, 32
    %v1002 = vpop.permute.xlu0 %1001
    %v1004 = vadd.f32 %v994, %v1002
    %v1005 = vtanh.pop %v1004
    %1007 = vrot.lane.b32.xlu0 %v1005, 32
    %v1008 = vpop.permute.xlu0 %1007
    %v1010 = vmul.f32 %v992, %v1008
    %1012 = vrot.lane.b32.xlu0 %v1010, 64
    %v1013 = vpop.permute.xlu0 %1012
    %s1015 = scalar_lea.vmem [#allocation3], 24
    %1016 = vst.msk [vmem:[%s1015] sm:$0xff] %vm83, %v1013
    %s1017 = smul.u32 4, 2
    %s1018 = smul.addr %s1017, 8
    %s1019 = scalar_lea.vmem [#allocation2], %s1018
    %v1020 = vld [vmem:[%s1019 + $0x8] sm:$0xff]
    %v1021 = vld [vmem:[#allocation4] sm:$0xff]
    %v1022 = vld [vmem:[#allocation4 + $0x8] sm:$0xff]
    %v1023 = vld [vmem:[#allocation4 + $0x10] sm:$0xff]
    %v1024 = vld [vmem:[#allocation4 + $0x18] sm:$0xff]
    %1025 = vrot.lane.b32.xlu0 %v899, 64
    %v1026 = vpop.permute.xlu0 %1025
    %v1027 = vsel %vm83, %v1026, 0
    %1029 = vmatprep.subr.mxu0 0.0
    %1030 = vmatpush1.msra.mxu0 %v1021
    %1031 = vmatprep.subr.mxu0 0.0
    %1032 = vmatpush1.msra.mxu0 %v1022
    %1033 = vmatprep.subr.mxu0 0.0
    %1034 = vmatpush1.msra.mxu0 %v1023
    %1035 = vmatprep.subr.mxu0 0.0
    %1036 = vmatpush1.msra.mxu0 %v1024
    %1037 = vmatprep.subr.mxu0 0.0
    %1038 = vmatpush1.msra.mxu0 0.0
    %1039 = vmatprep.subr.mxu0 0.0
    %1040 = vmatpush1.msra.mxu0 0.0
    %1041 = vmatprep.subr.mxu0 0.0
    %1042 = vmatpush1.msra.mxu0 0.0
    %1043 = vmatprep.subr.mxu0 0.0
    %1044 = vmatpush1.msra.mxu0 0.0
    %1045 = vmatprep.subr.mxu0 0.0
    %1046 = vmatpush1.msra.mxu0 0.0
    %1047 = vmatprep.subr.mxu0 0.0
    %1048 = vmatpush1.msra.mxu0 0.0
    %1049 = vmatprep.subr.mxu0 0.0
    %1050 = vmatpush1.msra.mxu0 0.0
    %1051 = vmatprep.subr.mxu0 0.0
    %1052 = vmatpush1.msra.mxu0 0.0
    %1053 = vmatprep.subr.mxu0 0.0
    %1054 = vmatpush1.msra.mxu0 0.0
    %1055 = vmatprep.subr.mxu0 0.0
    %1056 = vmatpush1.msra.mxu0 0.0
    %1057 = vmatprep.subr.mxu0 0.0
    %1058 = vmatpush1.msra.mxu0 0.0
    %1059 = vmatprep.subr.mxu0 0.0
    %1060 = vmatpush1.msra.mxu0 0.0
    %1061 = vmatprep.subr.mxu0 0.0
    %1062 = vmatpush1.msra.mxu0 0.0
    %1063 = vmatprep.subr.mxu0 0.0
    %1064 = vmatpush1.msra.mxu0 0.0
    %1065 = vmatprep.subr.mxu0 0.0
    %1066 = vmatpush1.msra.mxu0 0.0
    %1067 = vmatprep.subr.mxu0 0.0
    %1068 = vmatpush1.msra.mxu0 0.0
    %1069 = vmatprep.subr.mxu0 0.0
    %1070 = vmatpush1.msra.mxu0 0.0
    %1071 = vmatprep.subr.mxu0 0.0
    %1072 = vmatpush1.msra.mxu0 0.0
    %1073 = vmatprep.subr.mxu0 0.0
    %1074 = vmatpush1.msra.mxu0 0.0
    %1075 = vmatprep.subr.mxu0 0.0
    %1076 = vmatpush1.msra.mxu0 0.0
    %1077 = vmatprep.subr.mxu0 0.0
    %1078 = vmatpush1.msra.mxu0 0.0
    %1079 = vmatprep.subr.mxu0 0.0
    %1080 = vmatpush1.msra.mxu0 0.0
    %1081 = vmatprep.subr.mxu0 0.0
    %1082 = vmatpush1.msra.mxu0 0.0
    %1083 = vmatprep.subr.mxu0 0.0
    %1084 = vmatpush1.msra.mxu0 0.0
    %1085 = vmatprep.subr.mxu0 0.0
    %1086 = vmatpush1.msra.mxu0 0.0
    %1087 = vmatprep.subr.mxu0 0.0
    %1088 = vmatpush1.msra.mxu0 0.0
    %1089 = vmatprep.subr.mxu0 0.0
    %1090 = vmatpush1.msra.mxu0 0.0
    %1091 = vmatprep.subr.mxu0 0.0
    %1092 = vmatpush1.msra.mxu0 0.0
    %1093 = vmatprep.mubr.f32.mxu0 0.0
    %1094 = vmatmul.mubr.f32.gmra.mrb[0].mxu0 %v1027
    %v1095 = vpop.f32.mrb[0].mxu0
    %v1096 = vadd.f32 0.0, %v1095
    %v1097 = vpop.f32.mrb[0].mxu0
    %1098 = vdwg.mxu0
    %v1099 = vadd.f32 %v1020, %v1096
    %v1100 = vxor.u32 %v1099, 2147483648
    %v1101 = vmul.f32 %v1100, 1.442695
    %v1102 = vpow.pop %v1101
    %v1103 = vadd.f32 %v1102, 1.0
    %v1104 = vrcp.pop %v1103
    %v1105 = vmul.f32 1.0, %v1104
    %v1106 = vtanh.pop %v1099
    %v1107 = vmul.f32 %v1105, %v893
    %1109 = vrot.lane.b32.xlu0 %v1106, 32
    %v1110 = vpop.permute.xlu0 %1109
    %v1112 = vmul.f32 %v1105, %v1110
    %1114 = vrot.lane.b32.xlu0 %v1112, 32
    %v1115 = vpop.permute.xlu0 %1114
    %v1117 = vadd.f32 %v1107, %v1115
    %v1118 = vtanh.pop %v1117
    %1120 = vrot.lane.b32.xlu0 %v1118, 32
    %v1121 = vpop.permute.xlu0 %1120
    %v1123 = vmul.f32 %v1105, %v1121
    %1125 = vrot.lane.b32.xlu0 %v1123, 96
    %v1126 = vpop.permute.xlu0 %1125
    %s1128 = scalar_lea.vmem [#allocation3], 32
    %1129 = vst.msk [vmem:[%s1128] sm:$0xff] %vm456, %v1126
    %v1130 = vld [vmem:[%s1019] sm:$0xff]
    %v1131 = vld [vmem:[%s3] sm:$0xff]
    %v1132 = vld [vmem:[%s3 + $0x8] sm:$0xff]
    %v1133 = vld [vmem:[%s3 + $0x10] sm:$0xff]
    %v1134 = vld [vmem:[%s3 + $0x18] sm:$0xff]
    %v1135 = vsel %vm83, %v1013, 0
    %1137 = vmatprep.subr.mxu0 0.0
    %1138 = vmatpush1.msra.mxu0 %v1131
    %1139 = vmatprep.subr.mxu0 0.0
    %1140 = vmatpush1.msra.mxu0 %v1132
    %1141 = vmatprep.subr.mxu0 0.0
    %1142 = vmatpush1.msra.mxu0 %v1133
    %1143 = vmatprep.subr.mxu0 0.0
    %1144 = vmatpush1.msra.mxu0 %v1134
    %1145 = vmatprep.subr.mxu0 0.0
    %1146 = vmatpush1.msra.mxu0 0.0
    %1147 = vmatprep.subr.mxu0 0.0
    %1148 = vmatpush1.msra.mxu0 0.0
    %1149 = vmatprep.subr.mxu0 0.0
    %1150 = vmatpush1.msra.mxu0 0.0
    %1151 = vmatprep.subr.mxu0 0.0
    %1152 = vmatpush1.msra.mxu0 0.0
    %1153 = vmatprep.subr.mxu0 0.0
    %1154 = vmatpush1.msra.mxu0 0.0
    %1155 = vmatprep.subr.mxu0 0.0
    %1156 = vmatpush1.msra.mxu0 0.0
    %1157 = vmatprep.subr.mxu0 0.0
    %1158 = vmatpush1.msra.mxu0 0.0
    %1159 = vmatprep.subr.mxu0 0.0
    %1160 = vmatpush1.msra.mxu0 0.0
    %1161 = vmatprep.subr.mxu0 0.0
    %1162 = vmatpush1.msra.mxu0 0.0
    %1163 = vmatprep.subr.mxu0 0.0
    %1164 = vmatpush1.msra.mxu0 0.0
    %1165 = vmatprep.subr.mxu0 0.0
    %1166 = vmatpush1.msra.mxu0 0.0
    %1167 = vmatprep.subr.mxu0 0.0
    %1168 = vmatpush1.msra.mxu0 0.0
    %1169 = vmatprep.subr.mxu0 0.0
    %1170 = vmatpush1.msra.mxu0 0.0
    %1171 = vmatprep.subr.mxu0 0.0
    %1172 = vmatpush1.msra.mxu0 0.0
    %1173 = vmatprep.subr.mxu0 0.0
    %1174 = vmatpush1.msra.mxu0 0.0
    %1175 = vmatprep.subr.mxu0 0.0
    %1176 = vmatpush1.msra.mxu0 0.0
    %1177 = vmatprep.subr.mxu0 0.0
    %1178 = vmatpush1.msra.mxu0 0.0
    %1179 = vmatprep.subr.mxu0 0.0
    %1180 = vmatpush1.msra.mxu0 0.0
    %1181 = vmatprep.subr.mxu0 0.0
    %1182 = vmatpush1.msra.mxu0 0.0
    %1183 = vmatprep.subr.mxu0 0.0
    %1184 = vmatpush1.msra.mxu0 0.0
    %1185 = vmatprep.subr.mxu0 0.0
    %1186 = vmatpush1.msra.mxu0 0.0
    %1187 = vmatprep.subr.mxu0 0.0
    %1188 = vmatpush1.msra.mxu0 0.0
    %1189 = vmatprep.subr.mxu0 0.0
    %1190 = vmatpush1.msra.mxu0 0.0
    %1191 = vmatprep.subr.mxu0 0.0
    %1192 = vmatpush1.msra.mxu0 0.0
    %1193 = vmatprep.subr.mxu0 0.0
    %1194 = vmatpush1.msra.mxu0 0.0
    %1195 = vmatprep.subr.mxu0 0.0
    %1196 = vmatpush1.msra.mxu0 0.0
    %1197 = vmatprep.subr.mxu0 0.0
    %1198 = vmatpush1.msra.mxu0 0.0
    %1199 = vmatprep.subr.mxu0 0.0
    %1200 = vmatpush1.msra.mxu0 0.0
    %1201 = vmatprep.mubr.f32.mxu0 0.0
    %1202 = vmatmul.mubr.f32.gmra.mrb[0].mxu0 %v1135
    %v1203 = vpop.f32.mrb[0].mxu0
    %v1204 = vadd.f32 0.0, %v1203
    %v1205 = vpop.f32.mrb[0].mxu0
    %1206 = vdwg.mxu0
    %v1207 = vadd.f32 %v1130, %v1204
    %v1208 = vxor.u32 %v1207, 2147483648
    %v1209 = vmul.f32 %v1208, 1.442695
    %v1210 = vpow.pop %v1209
    %v1211 = vadd.f32 %v1210, 1.0
    %v1212 = vrcp.pop %v1211
    %v1213 = vmul.f32 1.0, %v1212
    %v1214 = vtanh.pop %v1207
    %v1215 = vmul.f32 %v1213, %v1004
    %1217 = vrot.lane.b32.xlu0 %v1214, 32
    %v1218 = vpop.permute.xlu0 %1217
    %v1220 = vmul.f32 %v1213, %v1218
    %1222 = vrot.lane.b32.xlu0 %v1220, 32
    %v1223 = vpop.permute.xlu0 %1222
    %v1225 = vadd.f32 %v1215, %v1223
    %v1226 = vtanh.pop %v1225
    %1228 = vrot.lane.b32.xlu0 %v1226, 32
    %v1229 = vpop.permute.xlu0 %1228
    %v1231 = vmul.f32 %v1213, %v1229
    %1233 = vrot.lane.b32.xlu0 %v1231, 64
    %v1234 = vpop.permute.xlu0 %1233
    %1236 = vst.msk [vmem:[%s1128] sm:$0xff] %vm83, %v1234
    %v1237 = vld [vmem:[%s908 + $0x8] sm:$0xff]
    %v1238 = vld [vmem:[#allocation4] sm:$0xff]
    %v1239 = vld [vmem:[#allocation4 + $0x8] sm:$0xff]
    %v1240 = vld [vmem:[#allocation4 + $0x10] sm:$0xff]
    %v1241 = vld [vmem:[#allocation4 + $0x18] sm:$0xff]
    %1242 = vrot.lane.b32.xlu0 %v1123, 64
    %v1243 = vpop.permute.xlu0 %1242
    %v1244 = vsel %vm83, %v1243, 0
    %1246 = vmatprep.subr.mxu0 0.0
    %1247 = vmatpush1.msra.mxu0 %v1238
    %1248 = vmatprep.subr.mxu0 0.0
    %1249 = vmatpush1.msra.mxu0 %v1239
    %1250 = vmatprep.subr.mxu0 0.0
    %1251 = vmatpush1.msra.mxu0 %v1240
    %1252 = vmatprep.subr.mxu0 0.0
    %1253 = vmatpush1.msra.mxu0 %v1241
    %1254 = vmatprep.subr.mxu0 0.0
    %1255 = vmatpush1.msra.mxu0 0.0
    %1256 = vmatprep.subr.mxu0 0.0
    %1257 = vmatpush1.msra.mxu0 0.0
    %1258 = vmatprep.subr.mxu0 0.0
    %1259 = vmatpush1.msra.mxu0 0.0
    %1260 = vmatprep.subr.mxu0 0.0
    %1261 = vmatpush1.msra.mxu0 0.0
    %1262 = vmatprep.subr.mxu0 0.0
    %1263 = vmatpush1.msra.mxu0 0.0
    %1264 = vmatprep.subr.mxu0 0.0
    %1265 = vmatpush1.msra.mxu0 0.0
    %1266 = vmatprep.subr.mxu0 0.0
    %1267 = vmatpush1.msra.mxu0 0.0
    %1268 = vmatprep.subr.mxu0 0.0
    %1269 = vmatpush1.msra.mxu0 0.0
    %1270 = vmatprep.subr.mxu0 0.0
    %1271 = vmatpush1.msra.mxu0 0.0
    %1272 = vmatprep.subr.mxu0 0.0
    %1273 = vmatpush1.msra.mxu0 0.0
    %1274 = vmatprep.subr.mxu0 0.0
    %1275 = vmatpush1.msra.mxu0 0.0
    %1276 = vmatprep.subr.mxu0 0.0
    %1277 = vmatpush1.msra.mxu0 0.0
    %1278 = vmatprep.subr.mxu0 0.0
    %1279 = vmatpush1.msra.mxu0 0.0
    %1280 = vmatprep.subr.mxu0 0.0
    %1281 = vmatpush1.msra.mxu0 0.0
    %1282 = vmatprep.subr.mxu0 0.0
    %1283 = vmatpush1.msra.mxu0 0.0
    %1284 = vmatprep.subr.mxu0 0.0
    %1285 = vmatpush1.msra.mxu0 0.0
    %1286 = vmatprep.subr.mxu0 0.0
    %1287 = vmatpush1.msra.mxu0 0.0
    %1288 = vmatprep.subr.mxu0 0.0
    %1289 = vmatpush1.msra.mxu0 0.0
    %1290 = vmatprep.subr.mxu0 0.0
    %1291 = vmatpush1.msra.mxu0 0.0
    %1292 = vmatprep.subr.mxu0 0.0
    %1293 = vmatpush1.msra.mxu0 0.0
    %1294 = vmatprep.subr.mxu0 0.0
    %1295 = vmatpush1.msra.mxu0 0.0
    %1296 = vmatprep.subr.mxu0 0.0
    %1297 = vmatpush1.msra.mxu0 0.0
    %1298 = vmatprep.subr.mxu0 0.0
    %1299 = vmatpush1.msra.mxu0 0.0
    %1300 = vmatprep.subr.mxu0 0.0
    %1301 = vmatpush1.msra.mxu0 0.0
    %1302 = vmatprep.subr.mxu0 0.0
    %1303 = vmatpush1.msra.mxu0 0.0
    %1304 = vmatprep.subr.mxu0 0.0
    %1305 = vmatpush1.msra.mxu0 0.0
    %1306 = vmatprep.subr.mxu0 0.0
    %1307 = vmatpush1.msra.mxu0 0.0
    %1308 = vmatprep.subr.mxu0 0.0
    %1309 = vmatpush1.msra.mxu0 0.0
    %1310 = vmatprep.mubr.f32.mxu0 0.0
    %1311 = vmatmul.mubr.f32.gmra.mrb[0].mxu0 %v1244
    %v1312 = vpop.f32.mrb[0].mxu0
    %v1313 = vadd.f32 0.0, %v1312
    %v1314 = vpop.f32.mrb[0].mxu0
    %1315 = vdwg.mxu0
    %v1316 = vadd.f32 %v1237, %v1313
    %v1317 = vxor.u32 %v1316, 2147483648
    %v1318 = vmul.f32 %v1317, 1.442695
    %v1319 = vpow.pop %v1318
    %v1320 = vadd.f32 %v1319, 1.0
    %v1321 = vrcp.pop %v1320
    %v1322 = vmul.f32 1.0, %v1321
    %v1323 = vtanh.pop %v1316
    %v1324 = vmul.f32 %v1322, %v1117
    %1326 = vrot.lane.b32.xlu0 %v1323, 32
    %v1327 = vpop.permute.xlu0 %1326
    %v1329 = vmul.f32 %v1322, %v1327
    %1331 = vrot.lane.b32.xlu0 %v1329, 32
    %v1332 = vpop.permute.xlu0 %1331
    %v1334 = vadd.f32 %v1324, %v1332
    %v1335 = vtanh.pop %v1334
    %1337 = vrot.lane.b32.xlu0 %v1335, 32
    %v1338 = vpop.permute.xlu0 %1337
    %v1340 = vmul.f32 %v1322, %v1338
    %1342 = vrot.lane.b32.xlu0 %v1340, 96
    %v1343 = vpop.permute.xlu0 %1342
    %1345 = vst.msk [vmem:[%s1015] sm:$0xff] %vm456, %v1343
    %v1346 = vld [vmem:[%s795] sm:$0xff]
    %v1347 = vld [vmem:[%s3] sm:$0xff]
    %v1348 = vld [vmem:[%s3 + $0x8] sm:$0xff]
    %v1349 = vld [vmem:[%s3 + $0x10] sm:$0xff]
    %v1350 = vld [vmem:[%s3 + $0x18] sm:$0xff]
    %v1351 = vsel %vm83, %v1234, 0
    %1353 = vmatprep.subr.mxu0 0.0
    %1354 = vmatpush1.msra.mxu0 %v1347
    %1355 = vmatprep.subr.mxu0 0.0
    %1356 = vmatpush1.msra.mxu0 %v1348
    %1357 = vmatprep.subr.mxu0 0.0
    %1358 = vmatpush1.msra.mxu0 %v1349
    %1359 = vmatprep.subr.mxu0 0.0
    %1360 = vmatpush1.msra.mxu0 %v1350
    %1361 = vmatprep.subr.mxu0 0.0
    %1362 = vmatpush1.msra.mxu0 0.0
    %1363 = vmatprep.subr.mxu0 0.0
    %1364 = vmatpush1.msra.mxu0 0.0
    %1365 = vmatprep.subr.mxu0 0.0
    %1366 = vmatpush1.msra.mxu0 0.0
    %1367 = vmatprep.subr.mxu0 0.0
    %1368 = vmatpush1.msra.mxu0 0.0
    %1369 = vmatprep.subr.mxu0 0.0
    %1370 = vmatpush1.msra.mxu0 0.0
    %1371 = vmatprep.subr.mxu0 0.0
    %1372 = vmatpush1.msra.mxu0 0.0
    %1373 = vmatprep.subr.mxu0 0.0
    %1374 = vmatpush1.msra.mxu0 0.0
    %1375 = vmatprep.subr.mxu0 0.0
    %1376 = vmatpush1.msra.mxu0 0.0
    %1377 = vmatprep.subr.mxu0 0.0
    %1378 = vmatpush1.msra.mxu0 0.0
    %1379 = vmatprep.subr.mxu0 0.0
    %1380 = vmatpush1.msra.mxu0 0.0
    %1381 = vmatprep.subr.mxu0 0.0
    %1382 = vmatpush1.msra.mxu0 0.0
    %1383 = vmatprep.subr.mxu0 0.0
    %1384 = vmatpush1.msra.mxu0 0.0
    %1385 = vmatprep.subr.mxu0 0.0
    %1386 = vmatpush1.msra.mxu0 0.0
    %1387 = vmatprep.subr.mxu0 0.0
    %1388 = vmatpush1.msra.mxu0 0.0
    %1389 = vmatprep.subr.mxu0 0.0
    %1390 = vmatpush1.msra.mxu0 0.0
    %1391 = vmatprep.subr.mxu0 0.0
    %1392 = vmatpush1.msra.mxu0 0.0
    %1393 = vmatprep.subr.mxu0 0.0
    %1394 = vmatpush1.msra.mxu0 0.0
    %1395 = vmatprep.subr.mxu0 0.0
    %1396 = vmatpush1.msra.mxu0 0.0
    %1397 = vmatprep.subr.mxu0 0.0
    %1398 = vmatpush1.msra.mxu0 0.0
    %1399 = vmatprep.subr.mxu0 0.0
    %1400 = vmatpush1.msra.mxu0 0.0
    %1401 = vmatprep.subr.mxu0 0.0
    %1402 = vmatpush1.msra.mxu0 0.0
    %1403 = vmatprep.subr.mxu0 0.0
    %1404 = vmatpush1.msra.mxu0 0.0
    %1405 = vmatprep.subr.mxu0 0.0
    %1406 = vmatpush1.msra.mxu0 0.0
    %1407 = vmatprep.subr.mxu0 0.0
    %1408 = vmatpush1.msra.mxu0 0.0
    %1409 = vmatprep.subr.mxu0 0.0
    %1410 = vmatpush1.msra.mxu0 0.0
    %1411 = vmatprep.subr.mxu0 0.0
    %1412 = vmatpush1.msra.mxu0 0.0
    %1413 = vmatprep.subr.mxu0 0.0
    %1414 = vmatpush1.msra.mxu0 0.0
    %1415 = vmatprep.subr.mxu0 0.0
    %1416 = vmatpush1.msra.mxu0 0.0
    %1417 = vmatprep.mubr.f32.mxu0 0.0
    %1418 = vmatmul.mubr.f32.gmra.mrb[0].mxu0 %v1351
    %v1419 = vpop.f32.mrb[0].mxu0
    %v1420 = vadd.f32 0.0, %v1419
    %v1421 = vpop.f32.mrb[0].mxu0
    %1422 = vdwg.mxu0
    %v1423 = vadd.f32 %v1346, %v1420
    %v1424 = vxor.u32 %v1423, 2147483648
    %v1425 = vmul.f32 %v1424, 1.442695
    %v1426 = vpow.pop %v1425
    %v1427 = vadd.f32 %v1426, 1.0
    %v1428 = vrcp.pop %v1427
    %v1429 = vmul.f32 1.0, %v1428
    %v1430 = vtanh.pop %v1423
    %v1431 = vmul.f32 %v1429, %v1225
    %1433 = vrot.lane.b32.xlu0 %v1430, 32
    %v1434 = vpop.permute.xlu0 %1433
    %v1436 = vmul.f32 %v1429, %v1434
    %1438 = vrot.lane.b32.xlu0 %v1436, 32
    %v1439 = vpop.permute.xlu0 %1438
    %v1441 = vadd.f32 %v1431, %v1439
    %v1442 = vtanh.pop %v1441
    %1444 = vrot.lane.b32.xlu0 %v1442, 32
    %v1445 = vpop.permute.xlu0 %1444
    %v1447 = vmul.f32 %v1429, %v1445
    %1449 = vrot.lane.b32.xlu0 %v1447, 64
    %v1450 = vpop.permute.xlu0 %1449
    %1452 = vst.msk [vmem:[%s904] sm:$0xff] %vm83, %v1450
    %v1453 = vld [vmem:[%s684 + $0x8] sm:$0xff]
    %v1454 = vld [vmem:[#allocation4] sm:$0xff]
    %v1455 = vld [vmem:[#allocation4 + $0x8] sm:$0xff]
    %v1456 = vld [vmem:[#allocation4 + $0x10] sm:$0xff]
    %v1457 = vld [vmem:[#allocation4 + $0x18] sm:$0xff]
    %1458 = vrot.lane.b32.xlu0 %v1340, 64
    %v1459 = vpop.permute.xlu0 %1458
    %v1460 = vsel %vm83, %v1459, 0
    %1462 = vmatprep.subr.mxu0 0.0
    %1463 = vmatpush1.msra.mxu0 %v1454
    %1464 = vmatprep.subr.mxu0 0.0
    %1465 = vmatpush1.msra.mxu0 %v1455
    %1466 = vmatprep.subr.mxu0 0.0
    %1467 = vmatpush1.msra.mxu0 %v1456
    %1468 = vmatprep.subr.mxu0 0.0
    %1469 = vmatpush1.msra.mxu0 %v1457
    %1470 = vmatprep.subr.mxu0 0.0
    %1471 = vmatpush1.msra.mxu0 0.0
    %1472 = vmatprep.subr.mxu0 0.0
    %1473 = vmatpush1.msra.mxu0 0.0
    %1474 = vmatprep.subr.mxu0 0.0
    %1475 = vmatpush1.msra.mxu0 0.0
    %1476 = vmatprep.subr.mxu0 0.0
    %1477 = vmatpush1.msra.mxu0 0.0
    %1478 = vmatprep.subr.mxu0 0.0
    %1479 = vmatpush1.msra.mxu0 0.0
    %1480 = vmatprep.subr.mxu0 0.0
    %1481 = vmatpush1.msra.mxu0 0.0
    %1482 = vmatprep.subr.mxu0 0.0
    %1483 = vmatpush1.msra.mxu0 0.0
    %1484 = vmatprep.subr.mxu0 0.0
    %1485 = vmatpush1.msra.mxu0 0.0
    %1486 = vmatprep.subr.mxu0 0.0
    %1487 = vmatpush1.msra.mxu0 0.0
    %1488 = vmatprep.subr.mxu0 0.0
    %1489 = vmatpush1.msra.mxu0 0.0
    %1490 = vmatprep.subr.mxu0 0.0
    %1491 = vmatpush1.msra.mxu0 0.0
    %1492 = vmatprep.subr.mxu0 0.0
    %1493 = vmatpush1.msra.mxu0 0.0
    %1494 = vmatprep.subr.mxu0 0.0
    %1495 = vmatpush1.msra.mxu0 0.0
    %1496 = vmatprep.subr.mxu0 0.0
    %1497 = vmatpush1.msra.mxu0 0.0
    %1498 = vmatprep.subr.mxu0 0.0
    %1499 = vmatpush1.msra.mxu0 0.0
    %1500 = vmatprep.subr.mxu0 0.0
    %1501 = vmatpush1.msra.mxu0 0.0
    %1502 = vmatprep.subr.mxu0 0.0
    %1503 = vmatpush1.msra.mxu0 0.0
    %1504 = vmatprep.subr.mxu0 0.0
    %1505 = vmatpush1.msra.mxu0 0.0
    %1506 = vmatprep.subr.mxu0 0.0
    %1507 = vmatpush1.msra.mxu0 0.0
    %1508 = vmatprep.subr.mxu0 0.0
    %1509 = vmatpush1.msra.mxu0 0.0
    %1510 = vmatprep.subr.mxu0 0.0
    %1511 = vmatpush1.msra.mxu0 0.0
    %1512 = vmatprep.subr.mxu0 0.0
    %1513 = vmatpush1.msra.mxu0 0.0
    %1514 = vmatprep.subr.mxu0 0.0
    %1515 = vmatpush1.msra.mxu0 0.0
    %1516 = vmatprep.subr.mxu0 0.0
    %1517 = vmatpush1.msra.mxu0 0.0
    %1518 = vmatprep.subr.mxu0 0.0
    %1519 = vmatpush1.msra.mxu0 0.0
    %1520 = vmatprep.subr.mxu0 0.0
    %1521 = vmatpush1.msra.mxu0 0.0
    %1522 = vmatprep.subr.mxu0 0.0
    %1523 = vmatpush1.msra.mxu0 0.0
    %1524 = vmatprep.subr.mxu0 0.0
    %1525 = vmatpush1.msra.mxu0 0.0
    %1526 = vmatprep.mubr.f32.mxu0 0.0
    %1527 = vmatmul.mubr.f32.gmra.mrb[0].mxu0 %v1460
    %v1528 = vpop.f32.mrb[0].mxu0
    %v1529 = vadd.f32 0.0, %v1528
    %v1530 = vpop.f32.mrb[0].mxu0
    %1531 = vdwg.mxu0
    %v1532 = vadd.f32 %v1453, %v1529
    %v1533 = vxor.u32 %v1532, 2147483648
    %v1534 = vmul.f32 %v1533, 1.442695
    %v1535 = vpow.pop %v1534
    %v1536 = vadd.f32 %v1535, 1.0
    %v1537 = vrcp.pop %v1536
    %v1538 = vmul.f32 1.0, %v1537
    %v1539 = vtanh.pop %v1532
    %v1540 = vmul.f32 %v1538, %v1334
    %1542 = vrot.lane.b32.xlu0 %v1539, 32
    %v1543 = vpop.permute.xlu0 %1542
    %v1545 = vmul.f32 %v1538, %v1543
    %1547 = vrot.lane.b32.xlu0 %v1545, 32
    %v1548 = vpop.permute.xlu0 %1547
    %v1550 = vadd.f32 %v1540, %v1548
    %v1551 = vtanh.pop %v1550
    %1553 = vrot.lane.b32.xlu0 %v1551, 32
    %v1554 = vpop.permute.xlu0 %1553
    %v1556 = vmul.f32 %v1538, %v1554
    %1558 = vrot.lane.b32.xlu0 %v1556, 96
    %v1559 = vpop.permute.xlu0 %1558
    %1561 = vst.msk [vmem:[%s791] sm:$0xff] %vm456, %v1559
    %v1562 = vld [vmem:[%s571] sm:$0xff]
    %v1563 = vld [vmem:[%s3] sm:$0xff]
    %v1564 = vld [vmem:[%s3 + $0x8] sm:$0xff]
    %v1565 = vld [vmem:[%s3 + $0x10] sm:$0xff]
    %v1566 = vld [vmem:[%s3 + $0x18] sm:$0xff]
    %v1567 = vsel %vm83, %v1450, 0
    %1569 = vmatprep.subr.mxu0 0.0
    %1570 = vmatpush1.msra.mxu0 %v1563
    %1571 = vmatprep.subr.mxu0 0.0
    %1572 = vmatpush1.msra.mxu0 %v1564
    %1573 = vmatprep.subr.mxu0 0.0
    %1574 = vmatpush1.msra.mxu0 %v1565
    %1575 = vmatprep.subr.mxu0 0.0
    %1576 = vmatpush1.msra.mxu0 %v1566
    %1577 = vmatprep.subr.mxu0 0.0
    %1578 = vmatpush1.msra.mxu0 0.0
    %1579 = vmatprep.subr.mxu0 0.0
    %1580 = vmatpush1.msra.mxu0 0.0
    %1581 = vmatprep.subr.mxu0 0.0
    %1582 = vmatpush1.msra.mxu0 0.0
    %1583 = vmatprep.subr.mxu0 0.0
    %1584 = vmatpush1.msra.mxu0 0.0
    %1585 = vmatprep.subr.mxu0 0.0
    %1586 = vmatpush1.msra.mxu0 0.0
    %1587 = vmatprep.subr.mxu0 0.0
    %1588 = vmatpush1.msra.mxu0 0.0
    %1589 = vmatprep.subr.mxu0 0.0
    %1590 = vmatpush1.msra.mxu0 0.0
    %1591 = vmatprep.subr.mxu0 0.0
    %1592 = vmatpush1.msra.mxu0 0.0
    %1593 = vmatprep.subr.mxu0 0.0
    %1594 = vmatpush1.msra.mxu0 0.0
    %1595 = vmatprep.subr.mxu0 0.0
    %1596 = vmatpush1.msra.mxu0 0.0
    %1597 = vmatprep.subr.mxu0 0.0
    %1598 = vmatpush1.msra.mxu0 0.0
    %1599 = vmatprep.subr.mxu0 0.0
    %1600 = vmatpush1.msra.mxu0 0.0
    %1601 = vmatprep.subr.mxu0 0.0
    %1602 = vmatpush1.msra.mxu0 0.0
    %1603 = vmatprep.subr.mxu0 0.0
    %1604 = vmatpush1.msra.mxu0 0.0
    %1605 = vmatprep.subr.mxu0 0.0
    %1606 = vmatpush1.msra.mxu0 0.0
    %1607 = vmatprep.subr.mxu0 0.0
    %1608 = vmatpush1.msra.mxu0 0.0
    %1609 = vmatprep.subr.mxu0 0.0
    %1610 = vmatpush1.msra.mxu0 0.0
    %1611 = vmatprep.subr.mxu0 0.0
    %1612 = vmatpush1.msra.mxu0 0.0
    %1613 = vmatprep.subr.mxu0 0.0
    %1614 = vmatpush1.msra.mxu0 0.0
    %1615 = vmatprep.subr.mxu0 0.0
    %1616 = vmatpush1.msra.mxu0 0.0
    %1617 = vmatprep.subr.mxu0 0.0
    %1618 = vmatpush1.msra.mxu0 0.0
    %1619 = vmatprep.subr.mxu0 0.0
    %1620 = vmatpush1.msra.mxu0 0.0
    %1621 = vmatprep.subr.mxu0 0.0
    %1622 = vmatpush1.msra.mxu0 0.0
    %1623 = vmatprep.subr.mxu0 0.0
    %1624 = vmatpush1.msra.mxu0 0.0
    %1625 = vmatprep.subr.mxu0 0.0
    %1626 = vmatpush1.msra.mxu0 0.0
    %1627 = vmatprep.subr.mxu0 0.0
    %1628 = vmatpush1.msra.mxu0 0.0
    %1629 = vmatprep.subr.mxu0 0.0
    %1630 = vmatpush1.msra.mxu0 0.0
    %1631 = vmatprep.subr.mxu0 0.0
    %1632 = vmatpush1.msra.mxu0 0.0
    %1633 = vmatprep.mubr.f32.mxu0 0.0
    %1634 = vmatmul.mubr.f32.gmra.mrb[0].mxu0 %v1567
    %v1635 = vpop.f32.mrb[0].mxu0
    %v1636 = vadd.f32 0.0, %v1635
    %v1637 = vpop.f32.mrb[0].mxu0
    %1638 = vdwg.mxu0
    %v1639 = vadd.f32 %v1562, %v1636
    %v1640 = vxor.u32 %v1639, 2147483648
    %v1641 = vmul.f32 %v1640, 1.442695
    %v1642 = vpow.pop %v1641
    %v1643 = vadd.f32 %v1642, 1.0
    %v1644 = vrcp.pop %v1643
    %v1645 = vmul.f32 1.0, %v1644
    %v1646 = vtanh.pop %v1639
    %v1647 = vmul.f32 %v1645, %v1441
    %1649 = vrot.lane.b32.xlu0 %v1646, 32
    %v1650 = vpop.permute.xlu0 %1649
    %v1652 = vmul.f32 %v1645, %v1650
    %1654 = vrot.lane.b32.xlu0 %v1652, 32
    %v1655 = vpop.permute.xlu0 %1654
    %v1657 = vadd.f32 %v1647, %v1655
    %v1658 = vtanh.pop %v1657
    %1660 = vrot.lane.b32.xlu0 %v1658, 32
    %v1661 = vpop.permute.xlu0 %1660
    %v1663 = vmul.f32 %v1645, %v1661
    %1665 = vrot.lane.b32.xlu0 %v1663, 64
    %v1666 = vpop.permute.xlu0 %1665
    %1668 = vst.msk [vmem:[%s680] sm:$0xff] %vm83, %v1666
    %v1669 = vld [vmem:[%s460 + $0x8] sm:$0xff]
    %v1670 = vld [vmem:[#allocation4] sm:$0xff]
    %v1671 = vld [vmem:[#allocation4 + $0x8] sm:$0xff]
    %v1672 = vld [vmem:[#allocation4 + $0x10] sm:$0xff]
    %v1673 = vld [vmem:[#allocation4 + $0x18] sm:$0xff]
    %1674 = vrot.lane.b32.xlu0 %v1556, 64
    %v1675 = vpop.permute.xlu0 %1674
    %v1676 = vsel %vm83, %v1675, 0
    %1678 = vmatprep.subr.mxu0 0.0
    %1679 = vmatpush1.msra.mxu0 %v1670
    %1680 = vmatprep.subr.mxu0 0.0
    %1681 = vmatpush1.msra.mxu0 %v1671
    %1682 = vmatprep.subr.mxu0 0.0
    %1683 = vmatpush1.msra.mxu0 %v1672
    %1684 = vmatprep.subr.mxu0 0.0
    %1685 = vmatpush1.msra.mxu0 %v1673
    %1686 = vmatprep.subr.mxu0 0.0
    %1687 = vmatpush1.msra.mxu0 0.0
    %1688 = vmatprep.subr.mxu0 0.0
    %1689 = vmatpush1.msra.mxu0 0.0
    %1690 = vmatprep.subr.mxu0 0.0
    %1691 = vmatpush1.msra.mxu0 0.0
    %1692 = vmatprep.subr.mxu0 0.0
    %1693 = vmatpush1.msra.mxu0 0.0
    %1694 = vmatprep.subr.mxu0 0.0
    %1695 = vmatpush1.msra.mxu0 0.0
    %1696 = vmatprep.subr.mxu0 0.0
    %1697 = vmatpush1.msra.mxu0 0.0
    %1698 = vmatprep.subr.mxu0 0.0
    %1699 = vmatpush1.msra.mxu0 0.0
    %1700 = vmatprep.subr.mxu0 0.0
    %1701 = vmatpush1.msra.mxu0 0.0
    %1702 = vmatprep.subr.mxu0 0.0
    %1703 = vmatpush1.msra.mxu0 0.0
    %1704 = vmatprep.subr.mxu0 0.0
    %1705 = vmatpush1.msra.mxu0 0.0
    %1706 = vmatprep.subr.mxu0 0.0
    %1707 = vmatpush1.msra.mxu0 0.0
    %1708 = vmatprep.subr.mxu0 0.0
    %1709 = vmatpush1.msra.mxu0 0.0
    %1710 = vmatprep.subr.mxu0 0.0
    %1711 = vmatpush1.msra.mxu0 0.0
    %1712 = vmatprep.subr.mxu0 0.0
    %1713 = vmatpush1.msra.mxu0 0.0
    %1714 = vmatprep.subr.mxu0 0.0
    %1715 = vmatpush1.msra.mxu0 0.0
    %1716 = vmatprep.subr.mxu0 0.0
    %1717 = vmatpush1.msra.mxu0 0.0
    %1718 = vmatprep.subr.mxu0 0.0
    %1719 = vmatpush1.msra.mxu0 0.0
    %1720 = vmatprep.subr.mxu0 0.0
    %1721 = vmatpush1.msra.mxu0 0.0
    %1722 = vmatprep.subr.mxu0 0.0
    %1723 = vmatpush1.msra.mxu0 0.0
    %1724 = vmatprep.subr.mxu0 0.0
    %1725 = vmatpush1.msra.mxu0 0.0
    %1726 = vmatprep.subr.mxu0 0.0
    %1727 = vmatpush1.msra.mxu0 0.0
    %1728 = vmatprep.subr.mxu0 0.0
    %1729 = vmatpush1.msra.mxu0 0.0
    %1730 = vmatprep.subr.mxu0 0.0
    %1731 = vmatpush1.msra.mxu0 0.0
    %1732 = vmatprep.subr.mxu0 0.0
    %1733 = vmatpush1.msra.mxu0 0.0
    %1734 = vmatprep.subr.mxu0 0.0
    %1735 = vmatpush1.msra.mxu0 0.0
    %1736 = vmatprep.subr.mxu0 0.0
    %1737 = vmatpush1.msra.mxu0 0.0
    %1738 = vmatprep.subr.mxu0 0.0
    %1739 = vmatpush1.msra.mxu0 0.0
    %1740 = vmatprep.subr.mxu0 0.0
    %1741 = vmatpush1.msra.mxu0 0.0
    %1742 = vmatprep.mubr.f32.mxu0 0.0
    %1743 = vmatmul.mubr.f32.gmra.mrb[0].mxu0 %v1676
    %v1744 = vpop.f32.mrb[0].mxu0
    %v1745 = vadd.f32 0.0, %v1744
    %v1746 = vpop.f32.mrb[0].mxu0
    %1747 = vdwg.mxu0
    %v1748 = vadd.f32 %v1669, %v1745
    %v1749 = vxor.u32 %v1748, 2147483648
    %v1750 = vmul.f32 %v1749, 1.442695
    %v1751 = vpow.pop %v1750
    %v1752 = vadd.f32 %v1751, 1.0
    %v1753 = vrcp.pop %v1752
    %v1754 = vmul.f32 1.0, %v1753
    %v1755 = vtanh.pop %v1748
    %v1756 = vmul.f32 %v1754, %v1550
    %1758 = vrot.lane.b32.xlu0 %v1755, 32
    %v1759 = vpop.permute.xlu0 %1758
    %v1761 = vmul.f32 %v1754, %v1759
    %1763 = vrot.lane.b32.xlu0 %v1761, 32
    %v1764 = vpop.permute.xlu0 %1763
    %v1766 = vadd.f32 %v1756, %v1764
    %v1767 = vtanh.pop %v1766
    %1769 = vrot.lane.b32.xlu0 %v1767, 32
    %v1770 = vpop.permute.xlu0 %1769
    %v1772 = vmul.f32 %v1754, %v1770
    %1774 = vrot.lane.b32.xlu0 %v1772, 96
    %v1775 = vpop.permute.xlu0 %1774
    %1777 = vst.msk [vmem:[%s567] sm:$0xff] %vm456, %v1775
    %v1778 = vld [vmem:[%s350] sm:$0xff]
    %v1779 = vld [vmem:[%s3] sm:$0xff]
    %v1780 = vld [vmem:[%s3 + $0x8] sm:$0xff]
    %v1781 = vld [vmem:[%s3 + $0x10] sm:$0xff]
    %v1782 = vld [vmem:[%s3 + $0x18] sm:$0xff]
    %v1783 = vsel %vm83, %v1666, 0
    %1785 = vmatprep.subr.mxu0 0.0
    %1786 = vmatpush1.msra.mxu0 %v1779
    %1787 = vmatprep.subr.mxu0 0.0
    %1788 = vmatpush1.msra.mxu0 %v1780
    %1789 = vmatprep.subr.mxu0 0.0
    %1790 = vmatpush1.msra.mxu0 %v1781
    %1791 = vmatprep.subr.mxu0 0.0
    %1792 = vmatpush1.msra.mxu0 %v1782
    %1793 = vmatprep.subr.mxu0 0.0
    %1794 = vmatpush1.msra.mxu0 0.0
    %1795 = vmatprep.subr.mxu0 0.0
    %1796 = vmatpush1.msra.mxu0 0.0
    %1797 = vmatprep.subr.mxu0 0.0
    %1798 = vmatpush1.msra.mxu0 0.0
    %1799 = vmatprep.subr.mxu0 0.0
    %1800 = vmatpush1.msra.mxu0 0.0
    %1801 = vmatprep.subr.mxu0 0.0
    %1802 = vmatpush1.msra.mxu0 0.0
    %1803 = vmatprep.subr.mxu0 0.0
    %1804 = vmatpush1.msra.mxu0 0.0
    %1805 = vmatprep.subr.mxu0 0.0
    %1806 = vmatpush1.msra.mxu0 0.0
    %1807 = vmatprep.subr.mxu0 0.0
    %1808 = vmatpush1.msra.mxu0 0.0
    %1809 = vmatprep.subr.mxu0 0.0
    %1810 = vmatpush1.msra.mxu0 0.0
    %1811 = vmatprep.subr.mxu0 0.0
    %1812 = vmatpush1.msra.mxu0 0.0
    %1813 = vmatprep.subr.mxu0 0.0
    %1814 = vmatpush1.msra.mxu0 0.0
    %1815 = vmatprep.subr.mxu0 0.0
    %1816 = vmatpush1.msra.mxu0 0.0
    %1817 = vmatprep.subr.mxu0 0.0
    %1818 = vmatpush1.msra.mxu0 0.0
    %1819 = vmatprep.subr.mxu0 0.0
    %1820 = vmatpush1.msra.mxu0 0.0
    %1821 = vmatprep.subr.mxu0 0.0
    %1822 = vmatpush1.msra.mxu0 0.0
    %1823 = vmatprep.subr.mxu0 0.0
    %1824 = vmatpush1.msra.mxu0 0.0
    %1825 = vmatprep.subr.mxu0 0.0
    %1826 = vmatpush1.msra.mxu0 0.0
    %1827 = vmatprep.subr.mxu0 0.0
    %1828 = vmatpush1.msra.mxu0 0.0
    %1829 = vmatprep.subr.mxu0 0.0
    %1830 = vmatpush1.msra.mxu0 0.0
    %1831 = vmatprep.subr.mxu0 0.0
    %1832 = vmatpush1.msra.mxu0 0.0
    %1833 = vmatprep.subr.mxu0 0.0
    %1834 = vmatpush1.msra.mxu0 0.0
    %1835 = vmatprep.subr.mxu0 0.0
    %1836 = vmatpush1.msra.mxu0 0.0
    %1837 = vmatprep.subr.mxu0 0.0
    %1838 = vmatpush1.msra.mxu0 0.0
    %1839 = vmatprep.subr.mxu0 0.0
    %1840 = vmatpush1.msra.mxu0 0.0
    %1841 = vmatprep.subr.mxu0 0.0
    %1842 = vmatpush1.msra.mxu0 0.0
    %1843 = vmatprep.subr.mxu0 0.0
    %1844 = vmatpush1.msra.mxu0 0.0
    %1845 = vmatprep.subr.mxu0 0.0
    %1846 = vmatpush1.msra.mxu0 0.0
    %1847 = vmatprep.subr.mxu0 0.0
    %1848 = vmatpush1.msra.mxu0 0.0
    %1849 = vmatprep.mubr.f32.mxu0 0.0
    %1850 = vmatmul.mubr.f32.gmra.mrb[0].mxu0 %v1783
    %v1851 = vpop.f32.mrb[0].mxu0
    %v1852 = vadd.f32 0.0, %v1851
    %v1853 = vpop.f32.mrb[0].mxu0
    %1854 = vdwg.mxu0
    %v1855 = vadd.f32 %v1778, %v1852
    %v1856 = vxor.u32 %v1855, 2147483648
    %v1857 = vmul.f32 %v1856, 1.442695
    %v1858 = vpow.pop %v1857
    %v1859 = vadd.f32 %v1858, 1.0
    %v1860 = vrcp.pop %v1859
    %v1861 = vmul.f32 1.0, %v1860
    %v1862 = vtanh.pop %v1855
    %v1863 = vmul.f32 %v1861, %v1657
    %1865 = vrot.lane.b32.xlu0 %v1862, 32
    %v1866 = vpop.permute.xlu0 %1865
    %v1868 = vmul.f32 %v1861, %v1866
    %1870 = vrot.lane.b32.xlu0 %v1868, 32
    %v1871 = vpop.permute.xlu0 %1870
    %v1873 = vadd.f32 %v1863, %v1871
    %v1874 = vtanh.pop %v1873
    %1876 = vrot.lane.b32.xlu0 %v1874, 32
    %v1877 = vpop.permute.xlu0 %1876
    %v1879 = vmul.f32 %v1861, %v1877
    %1881 = vrot.lane.b32.xlu0 %v1879, 64
    %v1882 = vpop.permute.xlu0 %1881
    %1884 = vst.msk [vmem:[%s455] sm:$0xff] %vm83, %v1882
    %v1885 = vld [vmem:[%s239 + $0x8] sm:$0xff]
    %v1886 = vld [vmem:[#allocation4] sm:$0xff]
    %v1887 = vld [vmem:[#allocation4 + $0x8] sm:$0xff]
    %v1888 = vld [vmem:[#allocation4 + $0x10] sm:$0xff]
    %v1889 = vld [vmem:[#allocation4 + $0x18] sm:$0xff]
    %1890 = vrot.lane.b32.xlu0 %v1772, 64
    %v1891 = vpop.permute.xlu0 %1890
    %v1892 = vsel %vm83, %v1891, 0
    %1894 = vmatprep.subr.mxu0 0.0
    %1895 = vmatpush1.msra.mxu0 %v1886
    %1896 = vmatprep.subr.mxu0 0.0
    %1897 = vmatpush1.msra.mxu0 %v1887
    %1898 = vmatprep.subr.mxu0 0.0
    %1899 = vmatpush1.msra.mxu0 %v1888
    %1900 = vmatprep.subr.mxu0 0.0
    %1901 = vmatpush1.msra.mxu0 %v1889
    %1902 = vmatprep.subr.mxu0 0.0
    %1903 = vmatpush1.msra.mxu0 0.0
    %1904 = vmatprep.subr.mxu0 0.0
    %1905 = vmatpush1.msra.mxu0 0.0
    %1906 = vmatprep.subr.mxu0 0.0
    %1907 = vmatpush1.msra.mxu0 0.0
    %1908 = vmatprep.subr.mxu0 0.0
    %1909 = vmatpush1.msra.mxu0 0.0
    %1910 = vmatprep.subr.mxu0 0.0
    %1911 = vmatpush1.msra.mxu0 0.0
    %1912 = vmatprep.subr.mxu0 0.0
    %1913 = vmatpush1.msra.mxu0 0.0
    %1914 = vmatprep.subr.mxu0 0.0
    %1915 = vmatpush1.msra.mxu0 0.0
    %1916 = vmatprep.subr.mxu0 0.0
    %1917 = vmatpush1.msra.mxu0 0.0
    %1918 = vmatprep.subr.mxu0 0.0
    %1919 = vmatpush1.msra.mxu0 0.0
    %1920 = vmatprep.subr.mxu0 0.0
    %1921 = vmatpush1.msra.mxu0 0.0
    %1922 = vmatprep.subr.mxu0 0.0
    %1923 = vmatpush1.msra.mxu0 0.0
    %1924 = vmatprep.subr.mxu0 0.0
    %1925 = vmatpush1.msra.mxu0 0.0
    %1926 = vmatprep.subr.mxu0 0.0
    %1927 = vmatpush1.msra.mxu0 0.0
    %1928 = vmatprep.subr.mxu0 0.0
    %1929 = vmatpush1.msra.mxu0 0.0
    %1930 = vmatprep.subr.mxu0 0.0
    %1931 = vmatpush1.msra.mxu0 0.0
    %1932 = vmatprep.subr.mxu0 0.0
    %1933 = vmatpush1.msra.mxu0 0.0
    %1934 = vmatprep.subr.mxu0 0.0
    %1935 = vmatpush1.msra.mxu0 0.0
    %1936 = vmatprep.subr.mxu0 0.0
    %1937 = vmatpush1.msra.mxu0 0.0
    %1938 = vmatprep.subr.mxu0 0.0
    %1939 = vmatpush1.msra.mxu0 0.0
    %1940 = vmatprep.subr.mxu0 0.0
    %1941 = vmatpush1.msra.mxu0 0.0
    %1942 = vmatprep.subr.mxu0 0.0
    %1943 = vmatpush1.msra.mxu0 0.0
    %1944 = vmatprep.subr.mxu0 0.0
    %1945 = vmatpush1.msra.mxu0 0.0
    %1946 = vmatprep.subr.mxu0 0.0
    %1947 = vmatpush1.msra.mxu0 0.0
    %1948 = vmatprep.subr.mxu0 0.0
    %1949 = vmatpush1.msra.mxu0 0.0
    %1950 = vmatprep.subr.mxu0 0.0
    %1951 = vmatpush1.msra.mxu0 0.0
    %1952 = vmatprep.subr.mxu0 0.0
    %1953 = vmatpush1.msra.mxu0 0.0
    %1954 = vmatprep.subr.mxu0 0.0
    %1955 = vmatpush1.msra.mxu0 0.0
    %1956 = vmatprep.subr.mxu0 0.0
    %1957 = vmatpush1.msra.mxu0 0.0
    %1958 = vmatprep.mubr.f32.mxu0 0.0
    %1959 = vmatmul.mubr.f32.gmra.mrb[0].mxu0 %v1892
    %v1960 = vpop.f32.mrb[0].mxu0
    %v1961 = vadd.f32 0.0, %v1960
    %v1962 = vpop.f32.mrb[0].mxu0
    %1963 = vdwg.mxu0
    %v1964 = vadd.f32 %v1885, %v1961
    %v1965 = vxor.u32 %v1964, 2147483648
    %v1966 = vmul.f32 %v1965, 1.442695
    %v1967 = vpow.pop %v1966
    %v1968 = vadd.f32 %v1967, 1.0
    %v1969 = vrcp.pop %v1968
    %v1970 = vmul.f32 1.0, %v1969
    %v1971 = vtanh.pop %v1964
    %v1972 = vmul.f32 %v1970, %v1766
    %1974 = vrot.lane.b32.xlu0 %v1971, 32
    %v1975 = vpop.permute.xlu0 %1974
    %v1977 = vmul.f32 %v1970, %v1975
    %1979 = vrot.lane.b32.xlu0 %v1977, 32
    %v1980 = vpop.permute.xlu0 %1979
    %v1982 = vadd.f32 %v1972, %v1980
    %v1983 = vtanh.pop %v1982
    %1985 = vrot.lane.b32.xlu0 %v1983, 32
    %v1986 = vpop.permute.xlu0 %1985
    %v1988 = vmul.f32 %v1970, %v1986
    %1990 = vrot.lane.b32.xlu0 %v1988, 96
    %v1991 = vpop.permute.xlu0 %1990
    %1993 = vst.msk [vmem:[#allocation3] sm:$0xff] %vm456, %v1991
    %v1994 = vld [vmem:[#allocation3] sm:$0xff]
    %v1995 = vld [vmem:[#allocation3 + $0x8] sm:$0xff]
    %v1996 = vld [vmem:[#allocation3 + $0x10] sm:$0xff]
    %v1997 = vld [vmem:[#allocation3 + $0x18] sm:$0xff]
    %v1998 = vld [vmem:[#allocation3 + $0x20] sm:$0xff]
    %v1999 = vld [vmem:[#allocation3 + $0x28] sm:$0xff]
    %v2000 = vld [vmem:[#allocation3 + $0x30] sm:$0xff]
    %v2001 = vld [vmem:[#allocation3 + $0x38] sm:$0xff]
    %v2002 = vld [vmem:[#allocation7] sm:$0xff]
    %v2003 = vld [vmem:[#allocation7 + $0x8] sm:$0xff]
    %v2004 = vld [vmem:[#allocation7 + $0x10] sm:$0xff]
    %v2005 = vld [vmem:[#allocation7 + $0x18] sm:$0xff]
    %v2006 = vld [vmem:[#allocation7 + $0x20] sm:$0xff]
    %v2007 = vld [vmem:[#allocation7 + $0x28] sm:$0xff]
    %v2008 = vld [vmem:[#allocation7 + $0x30] sm:$0xff]
    %v2009 = vld [vmem:[#allocation7 + $0x38] sm:$0xff]
    %v2010 = vld [vmem:[%s6] sm:$0x1]
    %v2012 = vlaneseq
    %v2013 = vshrl.u32 %v2012, 7
    %v2014 = vsub.s32 0, %v2013
    %v2015 = vrot.slane %v2010, %v2014
    %vm2017 = vcmask 523264
    %v2019 = vsel %vm2017, %v1994, 0
    %v2022 = vsel %vm2017, %v1995, 0
    %v2025 = vsel %vm2017, %v1996, 0
    %v2028 = vsel %vm2017, %v1997, 0
    %v2031 = vsel %vm2017, %v1998, 0
    %v2034 = vsel %vm2017, %v1999, 0
    %v2037 = vsel %vm2017, %v2000, 0
    %v2040 = vsel %vm2017, %v2001, 0
    %2042 = vmatprep.subr.mxu0 0.0
    %2043 = vmatpush1.msra.mxu0 %v2002
    %2044 = vmatprep.subr.mxu0 0.0
    %2045 = vmatpush1.msra.mxu0 %v2003
    %2046 = vmatprep.subr.mxu0 0.0
    %2047 = vmatpush1.msra.mxu0 %v2004
    %2048 = vmatprep.subr.mxu0 0.0
    %2049 = vmatpush1.msra.mxu0 %v2005
    %2050 = vmatprep.subr.mxu0 0.0
    %2051 = vmatpush1.msra.mxu0 %v2006
    %2052 = vmatprep.subr.mxu0 0.0
    %2053 = vmatpush1.msra.mxu0 %v2007
    %2054 = vmatprep.subr.mxu0 0.0
    %2055 = vmatpush1.msra.mxu0 %v2008
    %2056 = vmatprep.subr.mxu0 0.0
    %2057 = vmatpush1.msra.mxu0 %v2009
    %2058 = vmatprep.subr.mxu0 0.0
    %2059 = vmatpush1.msra.mxu0 0.0
    %2060 = vmatprep.subr.mxu0 0.0
    %2061 = vmatpush1.msra.mxu0 0.0
    %2062 = vmatprep.subr.mxu0 0.0
    %2063 = vmatpush1.msra.mxu0 0.0
    %2064 = vmatprep.subr.mxu0 0.0
    %2065 = vmatpush1.msra.mxu0 0.0
    %2066 = vmatprep.subr.mxu0 0.0
    %2067 = vmatpush1.msra.mxu0 0.0
    %2068 = vmatprep.subr.mxu0 0.0
    %2069 = vmatpush1.msra.mxu0 0.0
    %2070 = vmatprep.subr.mxu0 0.0
    %2071 = vmatpush1.msra.mxu0 0.0
    %2072 = vmatprep.subr.mxu0 0.0
    %2073 = vmatpush1.msra.mxu0 0.0
    %2074 = vmatprep.subr.mxu0 0.0
    %2075 = vmatpush1.msra.mxu0 0.0
    %2076 = vmatprep.subr.mxu0 0.0
    %2077 = vmatpush1.msra.mxu0 0.0
    %2078 = vmatprep.subr.mxu0 0.0
    %2079 = vmatpush1.msra.mxu0 0.0
    %2080 = vmatprep.subr.mxu0 0.0
    %2081 = vmatpush1.msra.mxu0 0.0
    %2082 = vmatprep.subr.mxu0 0.0
    %2083 = vmatpush1.msra.mxu0 0.0
    %2084 = vmatprep.subr.mxu0 0.0
    %2085 = vmatpush1.msra.mxu0 0.0
    %2086 = vmatprep.subr.mxu0 0.0
    %2087 = vmatpush1.msra.mxu0 0.0
    %2088 = vmatprep.subr.mxu0 0.0
    %2089 = vmatpush1.msra.mxu0 0.0
    %2090 = vmatprep.subr.mxu0 0.0
    %2091 = vmatpush1.msra.mxu0 0.0
    %2092 = vmatprep.subr.mxu0 0.0
    %2093 = vmatpush1.msra.mxu0 0.0
    %2094 = vmatprep.subr.mxu0 0.0
    %2095 = vmatpush1.msra.mxu0 0.0
    %2096 = vmatprep.subr.mxu0 0.0
    %2097 = vmatpush1.msra.mxu0 0.0
    %2098 = vmatprep.subr.mxu0 0.0
    %2099 = vmatpush1.msra.mxu0 0.0
    %2100 = vmatprep.subr.mxu0 0.0
    %2101 = vmatpush1.msra.mxu0 0.0
    %2102 = vmatprep.subr.mxu0 0.0
    %2103 = vmatpush1.msra.mxu0 0.0
    %2104 = vmatprep.subr.mxu0 0.0
    %2105 = vmatpush1.msra.mxu0 0.0
    %2106 = vmatprep.mubr.f32.mxu0 0.0
    %2107 = vmatmul.mubr.f32.gmra.mrb[0].mxu0 %v2019
    %v2108 = vpop.f32.mrb[0].mxu0
    %v2109 = vadd.f32 %v2015, %v2108
    %v2110 = vpop.f32.mrb[0].mxu0
    %2111 = vmatprep.mubr.f32.mxu0 0.0
    %2112 = vmatmul.mubr.f32.gmra.mrb[0].mxu0 %v2022
    %v2113 = vpop.f32.mrb[0].mxu0
    %v2114 = vadd.f32 %v2015, %v2113
    %v2115 = vpop.f32.mrb[0].mxu0
    %2116 = vmatprep.mubr.f32.mxu0 0.0
    %2117 = vmatmul.mubr.f32.gmra.mrb[0].mxu0 %v2025
    %v2118 = vpop.f32.mrb[0].mxu0
    %v2119 = vadd.f32 %v2015, %v2118
    %v2120 = vpop.f32.mrb[0].mxu0
    %2121 = vmatprep.mubr.f32.mxu0 0.0
    %2122 = vmatmul.mubr.f32.gmra.mrb[0].mxu0 %v2028
    %v2123 = vpop.f32.mrb[0].mxu0
    %v2124 = vadd.f32 %v2015, %v2123
    %v2125 = vpop.f32.mrb[0].mxu0
    %2126 = vmatprep.mubr.f32.mxu0 0.0
    %2127 = vmatmul.mubr.f32.gmra.mrb[0].mxu0 %v2031
    %v2128 = vpop.f32.mrb[0].mxu0
    %v2129 = vadd.f32 %v2015, %v2128
    %v2130 = vpop.f32.mrb[0].mxu0
    %2131 = vmatprep.mubr.f32.mxu0 0.0
    %2132 = vmatmul.mubr.f32.gmra.mrb[0].mxu0 %v2034
    %v2133 = vpop.f32.mrb[0].mxu0
    %v2134 = vadd.f32 %v2015, %v2133
    %v2135 = vpop.f32.mrb[0].mxu0
    %2136 = vmatprep.mubr.f32.mxu0 0.0
    %2137 = vmatmul.mubr.f32.gmra.mrb[0].mxu0 %v2037
    %v2138 = vpop.f32.mrb[0].mxu0
    %v2139 = vadd.f32 %v2015, %v2138
    %v2140 = vpop.f32.mrb[0].mxu0
    %2141 = vmatprep.mubr.f32.mxu0 0.0
    %2142 = vmatmul.mubr.f32.gmra.mrb[0].mxu0 %v2040
    %v2143 = vpop.f32.mrb[0].mxu0
    %v2144 = vadd.f32 %v2015, %v2143
    %v2145 = vpop.f32.mrb[0].mxu0
    %2146 = vdwg.mxu0
    %2147 = vst [vmem:[#allocation9] sm:$0xff] %v2109
    %2148 = vst [vmem:[#allocation9 + $0x8] sm:$0xff] %v2114
    %2149 = vst [vmem:[#allocation9 + $0x10] sm:$0xff] %v2119
    %2150 = vst [vmem:[#allocation9 + $0x18] sm:$0xff] %v2124
    %2151 = vst [vmem:[#allocation9 + $0x20] sm:$0xff] %v2129
    %2152 = vst [vmem:[#allocation9 + $0x28] sm:$0xff] %v2134
    %2153 = vst [vmem:[#allocation9 + $0x30] sm:$0xff] %v2139
    %2154 = vst [vmem:[#allocation9 + $0x38] sm:$0xff] %v2144
    // Predicated region
    $region38: #{tpu_custom_call.1} parent=1 // pred_check
      _
    $region39: #{tpu_custom_call.1} parent=1 // pred_check_branch
      %2156 = sbr.rel (0) target = $region41
    $region40: #{tpu_custom_call.1} parent=1 // pred_region
      %s2158 = ssub.s32 1024, 1024
      %2159 = vsyncadd [#allocation6], %s2158
      %s2160 = sshll.u32 [#allocation9], 4
      %s2161 = int_to_ptr.vmem [resolvable:$true] %s2160
      %2166 = dma.vmem_to_hbm [thread:$0]  %s2161, 1024, %s7, [#allocation6], 128, 128, 8
    $region41: #{tpu_custom_call.1} parent=1 // pred_fallthru
      _
    // Predicated region
    $region42: #{tpu_custom_call.1} parent=1 // pred_check
      _
    $region43: #{tpu_custom_call.1} parent=1 // pred_check_branch
      %2168 = sbr.rel (0) target = $region45
    $region44: #{tpu_custom_call.1} parent=1 // pred_region
      %2169 = dma.done [#allocation6], 1024
    $region45: #{tpu_custom_call.1} parent=1 // pred_fallthru
      _
    %2170 = vsyncpa [#allocation5], 1
    %2171 = vsyncpa [#allocation8], 1
    %2172 = vsyncpa [#allocation6], 1

</llo_original>
